<compile_context>
chip_gen: v5e
topology: v5e:2x2
jax: 0.10.0
libtpu: 0.0.40
codegen_flags: <defaults>
</compile_context>

<pallas_src>
import functools
import math

import jax
import jax.numpy as jnp
from jax.experimental import pallas as pl
from jax.experimental.pallas import tpu as pltpu


_LN_EPS = 1e-5


def _round_up(x, m):
    return ((x + m - 1) // m) * m


def _tanh_gelu(x):
    # 0.5 * x * (1 + tanh(sqrt(2/pi) * (x + 0.044715 * x^3)))  -- matches the GELU class.
    c = math.sqrt(2.0 / math.pi)
    return 0.5 * x * (1.0 + jnp.tanh(c * (x + 0.044715 * (x * x * x))))


def _masked_layer_norm(x, gamma, beta, dim):
    """LayerNorm over the last (lane) axis; only the first `dim` lanes are real data."""
    d_pad = x.shape[-1]
    mean = jnp.sum(x, axis=-1, keepdims=True) / dim          # padded lanes are zero
    cent = x - mean
    if dim < d_pad:
        lane = jax.lax.broadcasted_iota(jnp.int32, (1, d_pad), 1)
        cent = cent * (lane < dim).astype(x.dtype)           # keep padding out of the variance
    var = jnp.sum(cent * cent, axis=-1, keepdims=True) / dim
    # gamma/beta are zero on padded lanes -> output stays zero there.
    return cent * jax.lax.rsqrt(var + _LN_EPS) * gamma + beta


# ----------------------------------------------------------------------------
# Fused per-layer kernel: x = x + MHSA(LN1(x));  x = x + FFN(LN2(x))
# ----------------------------------------------------------------------------
def _encoder_layer_kernel(x_ref, ln1g_ref, ln1b_ref, wqkv_ref, wo_ref, bo_ref,
                          ln2g_ref, ln2b_ref, w1_ref, b1_ref, w2_ref, b2_ref,
                          o_ref, *, dim, n_real, heads, head_dim, inner_p, scale):
    bt, n_pad, d_pad = x_ref.shape
    m = bt * n_pad
    x2 = x_ref[...].reshape(m, d_pad)                        # major-dim merge (layout-free)

    # ---------------- Attention ----------------
    y16 = _masked_layer_norm(x2, ln1g_ref[...], ln1b_ref[...], dim).astype(jnp.bfloat16)
    # Fused QKV projection: one wide MXU matmul, f32 accumulation.
    qkv = jnp.dot(y16, wqkv_ref[...], preferred_element_type=jnp.float32)   # (M, 3*inner_p)
    q = qkv[:, 0 * inner_p:1 * inner_p].reshape(bt, n_pad, inner_p)         # 128-aligned slices
    k = qkv[:, 1 * inner_p:2 * inner_p].reshape(bt, n_pad, inner_p)
    v = qkv[:, 2 * inner_p:3 * inner_p].reshape(bt, n_pad, inner_p).astype(jnp.bfloat16)

    if n_pad > n_real:                                       # compile-time gated key mask
        kmask = jax.lax.broadcasted_iota(jnp.int32, (1, 1, n_pad), 2) < n_real

    head_outs = []
    for h in range(heads):                                   # static unroll over real heads
        sl = slice(h * head_dim, (h + 1) * head_dim)
        qh = q[:, :, sl].astype(jnp.bfloat16)                # (Bt, Np, hd)
        kh = k[:, :, sl].astype(jnp.bfloat16)
        s = jnp.einsum("bnd,bmd->bnm", qh, kh,
                       preferred_element_type=jnp.float32) * scale          # (Bt, Np, Np)
        if n_pad > n_real:
            s = jnp.where(kmask, s, jnp.float32(-1e30))
        s = s - jnp.max(s, axis=-1, keepdims=True)           # f32 softmax (v5e-safe)
        p = jnp.exp(s)
        p = p * pl.reciprocal(jnp.sum(p, axis=-1, keepdims=True), approx=True)
        head_outs.append(jnp.einsum("bnm,bmd->bnd", p.astype(jnp.bfloat16), v[:, :, sl],
                                    preferred_element_type=jnp.float32))    # (Bt, Np, hd)
    if inner_p > heads * head_dim:
        # Zero lanes matching Wo's zero-padded rows -> lane-dense (M, inner_p) operand.
        head_outs.append(jnp.zeros((bt, n_pad, inner_p - heads * head_dim), jnp.float32))
    att = jnp.concatenate(head_outs, axis=-1).reshape(m, inner_p).astype(jnp.bfloat16)
    # Single output projection (contraction depth inner_p, not per-head K=head_dim).
    x_attn = x2 + jnp.dot(att, wo_ref[...], preferred_element_type=jnp.float32) + bo_ref[...]

    # ---------------- FeedForward (fused; per-token, so tile-local) ----------------
    y2 = _masked_layer_norm(x_attn, ln2g_ref[...], ln2b_ref[...], dim)
    h1 = jnp.dot(y2.astype(jnp.bfloat16), w1_ref[...],
                 preferred_element_type=jnp.float32) + b1_ref[...]
    h1 = _tanh_gelu(h1)                                      # f32 GELU (v5e-safe)
    # Dropout(p=0.0) -> identity (skipped)
    z = jnp.dot(h1.astype(jnp.bfloat16), w2_ref[...],
                preferred_element_type=jnp.float32) + b2_ref[...]
    o_ref[...] = (x_attn + z).reshape(bt, n_pad, d_pad).astype(o_ref.dtype)


# ----------------------------------------------------------------------------
# Generation-aware sizing
# ----------------------------------------------------------------------------
def _tpu_vmem_capacity():
    try:
        info = pltpu.get_tpu_info()
        for attr in ("vmem_capacity_bytes", "vmem_size_bytes", "vmem_bytes"):
            v = getattr(info, attr, None)
            if v:
                return int(v)
    except Exception:
        pass
    return 64 * 1024 * 1024      # conservative fallback (v7x has the smallest VMEM)


def _pick_batch_tile(B, n_pad, d_pad, h_pad, inner_p, vmem_cap):
    """Largest divisor of B whose tile fits the VMEM budget; keep >=2 grid steps if possible."""
    budget = vmem_cap // 2                                   # leave headroom for compiler scratch
    # Resident, double-buffered bf16 weights: Wqkv + Wo + W1 + W2.
    w_bytes = 2 * 2 * (d_pad * 3 * inner_p + inner_p * d_pad + d_pad * h_pad + h_pad * d_pad)
    avail = max(budget - w_bytes, 2 * 1024 * 1024)
    # Per-row f32 working set: x/out tiles (double-buffered) + qkv + head-concat + FFN hidden
    # + LN/residual temporaries + one (Np,Np) score/prob pair per query row.
    per_row = 4 * (4 * d_pad + 3 * inner_p + inner_p + h_pad + 2 * d_pad + 2 * n_pad)
    rows_cap = max(n_pad, avail // per_row)
    target_rows = min(512, rows_cap)

    bt = 1
    for cand in range(1, B + 1):
        if B % cand == 0 and cand * n_pad <= target_rows:
            bt = cand
    if B >= 2 and B // bt < 2:                               # megacore: keep both v7x TCs busy
        for cand in range(bt - 1, 0, -1):
            if B % cand == 0:
                bt = cand
                break
    return max(1, bt)


# ----------------------------------------------------------------------------
# Pallas wrapper (one pallas_call per layer)
# ----------------------------------------------------------------------------
def _encoder_layer(xp, p, *, dim, n_real, heads, head_dim, inner_p, bt, vmem_limit):
    B, n_pad, d_pad = xp.shape
    h_pad = p["w1"].shape[1]
    kernel = functools.partial(_encoder_layer_kernel, dim=dim, n_real=n_real, heads=heads,
                               head_dim=head_dim, inner_p=inner_p, scale=head_dim ** (-0.5))
    const = lambda i: (0, 0)                                 # resident (constant block index)
    return pl.pallas_call(
        kernel,
        out_shape=jax.ShapeDtypeStruct((B, n_pad, d_pad), xp.dtype),
        grid_spec=pltpu.PrefetchScalarGridSpec(
            num_scalar_prefetch=0,
            grid=(B // bt,),
            in_specs=[
                pl.BlockSpec((bt, n_pad, d_pad), lambda i: (i, 0, 0)),  # x: streamed/pipelined
                pl.BlockSpec((1, d_pad), const),             # LN1 gamma
                pl.BlockSpec((1, d_pad), const),             # LN1 beta
                pl.BlockSpec((d_pad, 3 * inner_p), const),   # fused Wqkv (bf16)
                pl.BlockSpec((inner_p, d_pad), const),       # Wo (bf16)
                pl.BlockSpec((1, d_pad), const),             # bo
                pl.BlockSpec((1, d_pad), const),             # LN2 gamma
                pl.BlockSpec((1, d_pad), const),             # LN2 beta
                pl.BlockSpec((d_pad, h_pad), const),         # W1 (bf16)
                pl.BlockSpec((1, h_pad), const),             # b1
                pl.BlockSpec((h_pad, d_pad), const),         # W2 (bf16)
                pl.BlockSpec((1, d_pad), const),             # b2
            ],
            out_specs=pl.BlockSpec((bt, n_pad, d_pad), lambda i: (i, 0, 0)),
        ),
        compiler_params=pltpu.CompilerParams(
            dimension_semantics=("parallel",),               # independent batch tiles
            vmem_limit_bytes=int(vmem_limit),
        ),
    )(xp, p["ln1_g"], p["ln1_b"], p["wqkv"], p["wo"], p["bo"],
      p["ln2_g"], p["ln2_b"], p["w1"], p["b1"], p["w2"], p["b2"])


def prepare_encoder_params(layers, *, dim, heads, head_dim):
    """Hoisted (one-time) weight prep: pad channel dims to 128 multiples, fuse QKV, cast bf16."""
    inner = heads * head_dim
    inner_p = _round_up(inner, 128)
    if inner_p % head_dim != 0:          # keep per-head slicing exact for unusual head_dims
        inner_p = inner
    d_pad = _round_up(dim, 128)

    def pad2(w, rows, cols):
        return jnp.pad(w, ((0, rows - w.shape[0]), (0, cols - w.shape[1]))).astype(jnp.bfloat16)

    def pad1(v, n):
        return jnp.pad(v, (0, n - v.shape[0])).reshape(1, n).astype(jnp.float32)

    prepared = []
    for p in layers:
        h_pad = _round_up(p["w1"].shape[1], 128)
        wqkv = jnp.concatenate([pad2(p["wq"], d_pad, inner_p),
                                pad2(p["wk"], d_pad, inner_p),
                                pad2(p["wv"], d_pad, inner_p)], axis=1)
        prepared.append(dict(
            ln1_g=pad1(p["ln1_g"], d_pad), ln1_b=pad1(p["ln1_b"], d_pad),
            wqkv=wqkv,
            wo=pad2(p["wo"], inner_p, d_pad),
            bo=pad1(p["bo"], d_pad),
            ln2_g=pad1(p["ln2_g"], d_pad), ln2_b=pad1(p["ln2_b"], d_pad),
            w1=pad2(p["w1"], d_pad, h_pad), b1=pad1(p["b1"], h_pad),
            w2=pad2(p["w2"], h_pad, d_pad), b2=pad1(p["b2"], d_pad),
        ))
    meta = dict(dim=dim, d_pad=d_pad, inner_p=inner_p, heads=heads, head_dim=head_dim)
    return prepared, meta


def transformer_encoder_forward(x, prepared, meta):
    """x: (B, N, dim) f32. prepared/meta from prepare_encoder_params."""
    B, N, dim = x.shape
    assert dim == meta["dim"]
    d_pad, inner_p = meta["d_pad"], meta["inner_p"]
    heads, head_dim = meta["heads"], meta["head_dim"]
    n_pad = _round_up(N, 8)
    xp = jnp.pad(x, ((0, 0), (0, n_pad - N), (0, d_pad - dim)))

    h_pad = prepared[0]["w1"].shape[1]
    vmem_cap = _tpu_vmem_capacity()
    bt = _pick_batch_tile(B, n_pad, d_pad, h_pad, inner_p, vmem_cap)
    vmem_limit = min(vmem_cap * 3 // 4, 100 * 1024 * 1024)

    for p in prepared:
        xp = _encoder_layer(xp, p, dim=dim, n_real=N, heads=heads, head_dim=head_dim,
                            inner_p=inner_p, bt=bt, vmem_limit=vmem_limit)
    return xp[:, :N, :dim]


# ----------------------------------------------------------------------------
# Pure-JAX reference (matches the PyTorch forward in f32)
# ----------------------------------------------------------------------------
def _layer_norm_ref(x, g, b):
    mean = jnp.mean(x, axis=-1, keepdims=True)
    var = jnp.mean((x - mean) ** 2, axis=-1, keepdims=True)
    return (x - mean) * jax.lax.rsqrt(var + _LN_EPS) * g + b


def _attention_ref(y, p, heads, head_dim):
    B, N, _ = y.shape
    scale = head_dim ** (-0.5)

    def split(t):
        return t.reshape(B, N, heads, head_dim).transpose(0, 2, 1, 3)

    q, k, v = split(y @ p["wq"]), split(y @ p["wk"]), split(y @ p["wv"])
    dots = jnp.einsum("bhnd,bhmd->bhnm", q, k) * scale
    attn = jax.nn.softmax(dots, axis=-1)
    out = jnp.einsum("bhnm,bhmd->bhnd", attn, v)
    out = out.transpose(0, 2, 1, 3).reshape(B, N, heads * head_dim)
    return out @ p["wo"] + p["bo"]


def _ffn_ref(y, p):
    h = _tanh_gelu(y @ p["w1"] + p["b1"])
    return h @ p["w2"] + p["b2"]


def transformer_encoder_ref(x, layers, *, heads, head_dim):
    for p in layers:
        x = x + _attention_ref(_layer_norm_ref(x, p["ln1_g"], p["ln1_b"]), p, heads, head_dim)
        x = x + _ffn_ref(_layer_norm_ref(x, p["ln2_g"], p["ln2_b"]), p)
    return x


# ----------------------------------------------------------------------------
if __name__ == "__main__":
    # TransformerEncoder(dim=32, depth=2, heads=4, head_dim=16, mlp_dim=64) on x (2, 8, 32).
    B, N = 2, 8
    dim, depth, heads, head_dim, mlp_dim = 32, 2, 4, 16, 64
    inner = heads * head_dim   # project_out is True (heads != 1)

    key = jax.random.PRNGKey(0)
    key, kx = jax.random.split(key)
    x = jax.random.normal(kx, (B, N, dim), dtype=jnp.float32)

    layers = []
    for _ in range(depth):
        key, *ks = jax.random.split(key, 14)
        bnd_qkv = 1.0 / math.sqrt(dim)     # nn.Linear fan_in = dim
        bnd_out = 1.0 / math.sqrt(inner)   # to_out fan_in = inner
        bnd_h = 1.0 / math.sqrt(mlp_dim)   # second FFN linear fan_in = mlp_dim
        layers.append(dict(
            ln1_g=1.0 + 0.1 * jax.random.normal(ks[0], (dim,), jnp.float32),
            ln1_b=0.1 * jax.random.normal(ks[1], (dim,), jnp.float32),
            wq=jax.random.uniform(ks[2], (dim, inner), jnp.float32, -bnd_qkv, bnd_qkv),
            wk=jax.random.uniform(ks[3], (dim, inner), jnp.float32, -bnd_qkv, bnd_qkv),
            wv=jax.random.uniform(ks[4], (dim, inner), jnp.float32, -bnd_qkv, bnd_qkv),
            wo=jax.random.uniform(ks[5], (inner, dim), jnp.float32, -bnd_out, bnd_out),
            bo=jax.random.uniform(ks[6], (dim,), jnp.float32, -bnd_out, bnd_out),
            ln2_g=1.0 + 0.1 * jax.random.normal(ks[7], (dim,), jnp.float32),
            ln2_b=0.1 * jax.random.normal(ks[8], (dim,), jnp.float32),
            w1=jax.random.uniform(ks[9], (dim, mlp_dim), jnp.float32, -bnd_qkv, bnd_qkv),
            b1=jax.random.uniform(ks[10], (mlp_dim,), jnp.float32, -bnd_qkv, bnd_qkv),
            w2=jax.random.uniform(ks[11], (mlp_dim, dim), jnp.float32, -bnd_h, bnd_h),
            b2=jax.random.uniform(ks[12], (dim,), jnp.float32, -bnd_h, bnd_h),
        ))

    prepared, meta = prepare_encoder_params(layers, dim=dim, heads=heads, head_dim=head_dim)

    out = transformer_encoder_forward(x, prepared, meta)
    jax.block_until_ready(out)

    ref = transformer_encoder_ref(x, layers, heads=heads, head_dim=head_dim)
    assert out.shape == (B, N, dim), out.shape
    err = float(jnp.max(jnp.abs(out - ref)))
    # bf16 MXU operands (f32 accumulation) + approx reciprocal -> loosened tolerance.
    assert err < 5e-2, f"max abs error {err} vs pure-JAX reference"
    print("KERNEL_OK")
</pallas_src>

<mosaic_0001>
module attributes {stable_mosaic.version = 11 : i64} {
  func.func @_encoder_layer_kernel(%arg0: i32, %arg1: memref<1x8x128xf32, #tpu.memory_space<vmem>>, %arg2: memref<1x128xf32, #tpu.memory_space<vmem>>, %arg3: memref<1x128xf32, #tpu.memory_space<vmem>>, %arg4: memref<128x384xbf16, #tpu.memory_space<vmem>>, %arg5: memref<128x128xbf16, #tpu.memory_space<vmem>>, %arg6: memref<1x128xf32, #tpu.memory_space<vmem>>, %arg7: memref<1x128xf32, #tpu.memory_space<vmem>>, %arg8: memref<1x128xf32, #tpu.memory_space<vmem>>, %arg9: memref<128x128xbf16, #tpu.memory_space<vmem>>, %arg10: memref<1x128xf32, #tpu.memory_space<vmem>>, %arg11: memref<128x128xbf16, #tpu.memory_space<vmem>>, %arg12: memref<1x128xf32, #tpu.memory_space<vmem>>, %arg13: memref<1x8x128xf32, #tpu.memory_space<vmem>>) attributes {dimension_semantics = [#tpu.dimension_semantics<parallel>], iteration_bounds = array<i64: 2>, scalar_prefetch = 0 : i64, scratch_operands = 0 : i64, tpu.core_type = #tpu.core_type<tc>, window_params = [{transform_indices = @transform_0, window_bounds = array<i64: 1, 8, 128>}, {pipeline_mode = #tpu.pipeline_mode<synchronous>, transform_indices = @transform_1, window_bounds = array<i64: 1, 128>}, {pipeline_mode = #tpu.pipeline_mode<synchronous>, transform_indices = @transform_2, window_bounds = array<i64: 1, 128>}, {pipeline_mode = #tpu.pipeline_mode<synchronous>, transform_indices = @transform_3, window_bounds = array<i64: 128, 384>}, {pipeline_mode = #tpu.pipeline_mode<synchronous>, transform_indices = @transform_4, window_bounds = array<i64: 128, 128>}, {pipeline_mode = #tpu.pipeline_mode<synchronous>, transform_indices = @transform_5, window_bounds = array<i64: 1, 128>}, {pipeline_mode = #tpu.pipeline_mode<synchronous>, transform_indices = @transform_6, window_bounds = array<i64: 1, 128>}, {pipeline_mode = #tpu.pipeline_mode<synchronous>, transform_indices = @transform_7, window_bounds = array<i64: 1, 128>}, {pipeline_mode = #tpu.pipeline_mode<synchronous>, transform_indices = @transform_8, window_bounds = array<i64: 128, 128>}, {pipeline_mode = #tpu.pipeline_mode<synchronous>, transform_indices = @transform_9, window_bounds = array<i64: 1, 128>}, {pipeline_mode = #tpu.pipeline_mode<synchronous>, transform_indices = @transform_10, window_bounds = array<i64: 128, 128>}, {pipeline_mode = #tpu.pipeline_mode<synchronous>, transform_indices = @transform_11, window_bounds = array<i64: 1, 128>}, {transform_indices = @transform_12, window_bounds = array<i64: 1, 8, 128>}]} {
    %c0 = arith.constant 0 : index
    %c0_0 = arith.constant 0 : index
    %c0_1 = arith.constant 0 : index
    %0 = vector.load %arg1[%c0, %c0_0, %c0_1] : memref<1x8x128xf32, #tpu.memory_space<vmem>>, vector<1x8x128xf32>
    %1 = vector.shape_cast %0 : vector<1x8x128xf32> to vector<8x128xf32>
    %c0_2 = arith.constant 0 : index
    %c0_3 = arith.constant 0 : index
    %2 = vector.load %arg2[%c0_2, %c0_3] : memref<1x128xf32, #tpu.memory_space<vmem>>, vector<1x128xf32>
    %c0_4 = arith.constant 0 : index
    %c0_5 = arith.constant 0 : index
    %3 = vector.load %arg3[%c0_4, %c0_5] : memref<1x128xf32, #tpu.memory_space<vmem>>, vector<1x128xf32>
    %cst = arith.constant dense<0.000000e+00> : vector<8xf32>
    %4 = vector.multi_reduction <add>, %1, %cst [1] : vector<8x128xf32> to vector<8xf32>
    %5 = vector.shape_cast %4 : vector<8xf32> to vector<8x1xf32>
    %cst_6 = arith.constant 3.200000e+01 : f32
    %6 = vector.broadcast %cst_6 : f32 to vector<8x1xf32>
    %7 = arith.divf %5, %6 : vector<8x1xf32>
    %8 = vector.broadcast %7 : vector<8x1xf32> to vector<8x128xf32>
    %9 = arith.subf %1, %8 : vector<8x128xf32>
    %10 = tpu.iota {dimensions = array<i32: 1>} : vector<1x128xi32>
    %c32_i32 = arith.constant 32 : i32
    %11 = vector.broadcast %c32_i32 : i32 to vector<1x128xi32>
    %12 = arith.cmpi slt, %10, %11 : vector<1x128xi32>
    %13 = arith.extui %12 : vector<1x128xi1> to vector<1x128xi32>
    %14 = arith.sitofp %13 : vector<1x128xi32> to vector<1x128xf32>
    %15 = vector.broadcast %14 : vector<1x128xf32> to vector<8x128xf32>
    %16 = arith.mulf %9, %15 : vector<8x128xf32>
    %17 = arith.mulf %16, %16 : vector<8x128xf32>
    %cst_7 = arith.constant dense<0.000000e+00> : vector<8xf32>
    %18 = vector.multi_reduction <add>, %17, %cst_7 [1] : vector<8x128xf32> to vector<8xf32>
    %19 = vector.shape_cast %18 : vector<8xf32> to vector<8x1xf32>
    %cst_8 = arith.constant 3.200000e+01 : f32
    %20 = vector.broadcast %cst_8 : f32 to vector<8x1xf32>
    %21 = arith.divf %19, %20 : vector<8x1xf32>
    %cst_9 = arith.constant 9.99999974E-6 : f32
    %22 = vector.broadcast %cst_9 : f32 to vector<8x1xf32>
    %23 = arith.addf %21, %22 : vector<8x1xf32>
    %24 = math.rsqrt %23 : vector<8x1xf32>
    %25 = vector.broadcast %24 : vector<8x1xf32> to vector<8x128xf32>
    %26 = arith.mulf %16, %25 : vector<8x128xf32>
    %27 = vector.broadcast %2 : vector<1x128xf32> to vector<8x128xf32>
    %28 = arith.mulf %26, %27 : vector<8x128xf32>
    %29 = vector.broadcast %3 : vector<1x128xf32> to vector<8x128xf32>
    %30 = arith.addf %28, %29 : vector<8x128xf32>
    %31 = arith.truncf %30 : vector<8x128xf32> to vector<8x128xbf16>
    %c0_10 = arith.constant 0 : index
    %c0_11 = arith.constant 0 : index
    %32 = vector.load %arg4[%c0_10, %c0_11] : memref<128x384xbf16, #tpu.memory_space<vmem>>, vector<128x384xbf16>
    %cst_12 = arith.constant dense<0.000000e+00> : vector<8x384xf32>
    %33 = tpu.matmul %31, %32, %cst_12 {dimension_numbers = #tpu.dot_dimension_numbers<[1], [0], [0], [1], [0, 0, 1, 1], [], []>} : vector<8x128xbf16>, vector<128x384xbf16>, vector<8x384xf32> -> vector<8x384xf32>
    %34 = vector.extract_strided_slice %33 {offsets = [0, 0], sizes = [8, 128], strides = [1, 1]} : vector<8x384xf32> to vector<8x128xf32>
    %35 = vector.shape_cast %34 : vector<8x128xf32> to vector<1x8x128xf32>
    %36 = vector.extract_strided_slice %33 {offsets = [0, 128], sizes = [8, 128], strides = [1, 1]} : vector<8x384xf32> to vector<8x128xf32>
    %37 = vector.shape_cast %36 : vector<8x128xf32> to vector<1x8x128xf32>
    %38 = vector.extract_strided_slice %33 {offsets = [0, 256], sizes = [8, 128], strides = [1, 1]} : vector<8x384xf32> to vector<8x128xf32>
    %39 = vector.shape_cast %38 : vector<8x128xf32> to vector<1x8x128xf32>
    %40 = arith.truncf %39 : vector<1x8x128xf32> to vector<1x8x128xbf16>
    %41 = vector.extract_strided_slice %35 {offsets = [0, 0, 0], sizes = [1, 8, 16], strides = [1, 1, 1]} : vector<1x8x128xf32> to vector<1x8x16xf32>
    %42 = arith.truncf %41 : vector<1x8x16xf32> to vector<1x8x16xbf16>
    %43 = vector.extract_strided_slice %37 {offsets = [0, 0, 0], sizes = [1, 8, 16], strides = [1, 1, 1]} : vector<1x8x128xf32> to vector<1x8x16xf32>
    %44 = arith.truncf %43 : vector<1x8x16xf32> to vector<1x8x16xbf16>
    "tpu.trace_start"() <{level = 10 : i32, message = "bnd,bmd->bnm"}> : () -> ()
    %cst_13 = arith.constant dense<0.000000e+00> : vector<1x8x8xf32>
    %45 = tpu.matmul %42, %44, %cst_13 {dimension_numbers = #tpu.dot_dimension_numbers<[2], [2], [1], [1], [0, 0, 0, 1, 1, 1], [0], [0]>} : vector<1x8x16xbf16>, vector<1x8x16xbf16>, vector<1x8x8xf32> -> vector<1x8x8xf32>
    "tpu.trace_stop"() : () -> ()
    %cst_14 = arith.constant 2.500000e-01 : f32
    %46 = vector.broadcast %cst_14 : f32 to vector<1x8x8xf32>
    %47 = arith.mulf %45, %46 : vector<1x8x8xf32>
    %cst_15 = arith.constant dense<0xFF800000> : vector<1x8xf32>
    %48 = vector.multi_reduction <maximumf>, %47, %cst_15 [2] : vector<1x8x8xf32> to vector<1x8xf32>
    %49 = vector.shape_cast %48 : vector<1x8xf32> to vector<1x8x1xf32>
    %50 = vector.broadcast %49 : vector<1x8x1xf32> to vector<1x8x8xf32>
    %51 = arith.subf %47, %50 : vector<1x8x8xf32>
    %52 = math.exp %51 : vector<1x8x8xf32>
    %cst_16 = arith.constant dense<0.000000e+00> : vector<1x8xf32>
    %53 = vector.multi_reduction <add>, %52, %cst_16 [2] : vector<1x8x8xf32> to vector<1x8xf32>
    %54 = vector.shape_cast %53 : vector<1x8xf32> to vector<1x8x1xf32>
    %55 = tpu.reciprocal %54 {approx = true} : vector<1x8x1xf32> -> vector<1x8x1xf32>
    %56 = vector.broadcast %55 : vector<1x8x1xf32> to vector<1x8x8xf32>
    %57 = arith.mulf %52, %56 : vector<1x8x8xf32>
    %58 = arith.truncf %57 : vector<1x8x8xf32> to vector<1x8x8xbf16>
    %59 = vector.extract_strided_slice %40 {offsets = [0, 0, 0], sizes = [1, 8, 16], strides = [1, 1, 1]} : vector<1x8x128xbf16> to vector<1x8x16xbf16>
    "tpu.trace_start"() <{level = 10 : i32, message = "bnm,bmd->bnd"}> : () -> ()
    %cst_17 = arith.constant dense<0.000000e+00> : vector<1x8x16xf32>
    %60 = tpu.matmul %58, %59, %cst_17 {dimension_numbers = #tpu.dot_dimension_numbers<[2], [1], [1], [2], [0, 0, 0, 1, 1, 2], [0], [0]>} : vector<1x8x8xbf16>, vector<1x8x16xbf16>, vector<1x8x16xf32> -> vector<1x8x16xf32>
    "tpu.trace_stop"() : () -> ()
    %61 = vector.extract_strided_slice %35 {offsets = [0, 0, 16], sizes = [1, 8, 16], strides = [1, 1, 1]} : vector<1x8x128xf32> to vector<1x8x16xf32>
    %62 = arith.truncf %61 : vector<1x8x16xf32> to vector<1x8x16xbf16>
    %63 = vector.extract_strided_slice %37 {offsets = [0, 0, 16], sizes = [1, 8, 16], strides = [1, 1, 1]} : vector<1x8x128xf32> to vector<1x8x16xf32>
    %64 = arith.truncf %63 : vector<1x8x16xf32> to vector<1x8x16xbf16>
    "tpu.trace_start"() <{level = 10 : i32, message = "bnd,bmd->bnm"}> : () -> ()
    %cst_18 = arith.constant dense<0.000000e+00> : vector<1x8x8xf32>
    %65 = tpu.matmul %62, %64, %cst_18 {dimension_numbers = #tpu.dot_dimension_numbers<[2], [2], [1], [1], [0, 0, 0, 1, 1, 1], [0], [0]>} : vector<1x8x16xbf16>, vector<1x8x16xbf16>, vector<1x8x8xf32> -> vector<1x8x8xf32>
    "tpu.trace_stop"() : () -> ()
    %cst_19 = arith.constant 2.500000e-01 : f32
    %66 = vector.broadcast %cst_19 : f32 to vector<1x8x8xf32>
    %67 = arith.mulf %65, %66 : vector<1x8x8xf32>
    %cst_20 = arith.constant dense<0xFF800000> : vector<1x8xf32>
    %68 = vector.multi_reduction <maximumf>, %67, %cst_20 [2] : vector<1x8x8xf32> to vector<1x8xf32>
    %69 = vector.shape_cast %68 : vector<1x8xf32> to vector<1x8x1xf32>
    %70 = vector.broadcast %69 : vector<1x8x1xf32> to vector<1x8x8xf32>
    %71 = arith.subf %67, %70 : vector<1x8x8xf32>
    %72 = math.exp %71 : vector<1x8x8xf32>
    %cst_21 = arith.constant dense<0.000000e+00> : vector<1x8xf32>
    %73 = vector.multi_reduction <add>, %72, %cst_21 [2] : vector<1x8x8xf32> to vector<1x8xf32>
    %74 = vector.shape_cast %73 : vector<1x8xf32> to vector<1x8x1xf32>
    %75 = tpu.reciprocal %74 {approx = true} : vector<1x8x1xf32> -> vector<1x8x1xf32>
    %76 = vector.broadcast %75 : vector<1x8x1xf32> to vector<1x8x8xf32>
    %77 = arith.mulf %72, %76 : vector<1x8x8xf32>
    %78 = arith.truncf %77 : vector<1x8x8xf32> to vector<1x8x8xbf16>
    %79 = vector.extract_strided_slice %40 {offsets = [0, 0, 16], sizes = [1, 8, 16], strides = [1, 1, 1]} : vector<1x8x128xbf16> to vector<1x8x16xbf16>
    "tpu.trace_start"() <{level = 10 : i32, message = "bnm,bmd->bnd"}> : () -> ()
    %cst_22 = arith.constant dense<0.000000e+00> : vector<1x8x16xf32>
    %80 = tpu.matmul %78, %79, %cst_22 {dimension_numbers = #tpu.dot_dimension_numbers<[2], [1], [1], [2], [0, 0, 0, 1, 1, 2], [0], [0]>} : vector<1x8x8xbf16>, vector<1x8x16xbf16>, vector<1x8x16xf32> -> vector<1x8x16xf32>
    "tpu.trace_stop"() : () -> ()
    %81 = vector.extract_strided_slice %35 {offsets = [0, 0, 32], sizes = [1, 8, 16], strides = [1, 1, 1]} : vector<1x8x128xf32> to vector<1x8x16xf32>
    %82 = arith.truncf %81 : vector<1x8x16xf32> to vector<1x8x16xbf16>
    %83 = vector.extract_strided_slice %37 {offsets = [0, 0, 32], sizes = [1, 8, 16], strides = [1, 1, 1]} : vector<1x8x128xf32> to vector<1x8x16xf32>
    %84 = arith.truncf %83 : vector<1x8x16xf32> to vector<1x8x16xbf16>
    "tpu.trace_start"() <{level = 10 : i32, message = "bnd,bmd->bnm"}> : () -> ()
    %cst_23 = arith.constant dense<0.000000e+00> : vector<1x8x8xf32>
    %85 = tpu.matmul %82, %84, %cst_23 {dimension_numbers = #tpu.dot_dimension_numbers<[2], [2], [1], [1], [0, 0, 0, 1, 1, 1], [0], [0]>} : vector<1x8x16xbf16>, vector<1x8x16xbf16>, vector<1x8x8xf32> -> vector<1x8x8xf32>
    "tpu.trace_stop"() : () -> ()
    %cst_24 = arith.constant 2.500000e-01 : f32
    %86 = vector.broadcast %cst_24 : f32 to vector<1x8x8xf32>
    %87 = arith.mulf %85, %86 : vector<1x8x8xf32>
    %cst_25 = arith.constant dense<0xFF800000> : vector<1x8xf32>
    %88 = vector.multi_reduction <maximumf>, %87, %cst_25 [2] : vector<1x8x8xf32> to vector<1x8xf32>
    %89 = vector.shape_cast %88 : vector<1x8xf32> to vector<1x8x1xf32>
    %90 = vector.broadcast %89 : vector<1x8x1xf32> to vector<1x8x8xf32>
    %91 = arith.subf %87, %90 : vector<1x8x8xf32>
    %92 = math.exp %91 : vector<1x8x8xf32>
    %cst_26 = arith.constant dense<0.000000e+00> : vector<1x8xf32>
    %93 = vector.multi_reduction <add>, %92, %cst_26 [2] : vector<1x8x8xf32> to vector<1x8xf32>
    %94 = vector.shape_cast %93 : vector<1x8xf32> to vector<1x8x1xf32>
    %95 = tpu.reciprocal %94 {approx = true} : vector<1x8x1xf32> -> vector<1x8x1xf32>
    %96 = vector.broadcast %95 : vector<1x8x1xf32> to vector<1x8x8xf32>
    %97 = arith.mulf %92, %96 : vector<1x8x8xf32>
    %98 = arith.truncf %97 : vector<1x8x8xf32> to vector<1x8x8xbf16>
    %99 = vector.extract_strided_slice %40 {offsets = [0, 0, 32], sizes = [1, 8, 16], strides = [1, 1, 1]} : vector<1x8x128xbf16> to vector<1x8x16xbf16>
    "tpu.trace_start"() <{level = 10 : i32, message = "bnm,bmd->bnd"}> : () -> ()
    %cst_27 = arith.constant dense<0.000000e+00> : vector<1x8x16xf32>
    %100 = tpu.matmul %98, %99, %cst_27 {dimension_numbers = #tpu.dot_dimension_numbers<[2], [1], [1], [2], [0, 0, 0, 1, 1, 2], [0], [0]>} : vector<1x8x8xbf16>, vector<1x8x16xbf16>, vector<1x8x16xf32> -> vector<1x8x16xf32>
    "tpu.trace_stop"() : () -> ()
    %101 = vector.extract_strided_slice %35 {offsets = [0, 0, 48], sizes = [1, 8, 16], strides = [1, 1, 1]} : vector<1x8x128xf32> to vector<1x8x16xf32>
    %102 = arith.truncf %101 : vector<1x8x16xf32> to vector<1x8x16xbf16>
    %103 = vector.extract_strided_slice %37 {offsets = [0, 0, 48], sizes = [1, 8, 16], strides = [1, 1, 1]} : vector<1x8x128xf32> to vector<1x8x16xf32>
    %104 = arith.truncf %103 : vector<1x8x16xf32> to vector<1x8x16xbf16>
    "tpu.trace_start"() <{level = 10 : i32, message = "bnd,bmd->bnm"}> : () -> ()
    %cst_28 = arith.constant dense<0.000000e+00> : vector<1x8x8xf32>
    %105 = tpu.matmul %102, %104, %cst_28 {dimension_numbers = #tpu.dot_dimension_numbers<[2], [2], [1], [1], [0, 0, 0, 1, 1, 1], [0], [0]>} : vector<1x8x16xbf16>, vector<1x8x16xbf16>, vector<1x8x8xf32> -> vector<1x8x8xf32>
    "tpu.trace_stop"() : () -> ()
    %cst_29 = arith.constant 2.500000e-01 : f32
    %106 = vector.broadcast %cst_29 : f32 to vector<1x8x8xf32>
    %107 = arith.mulf %105, %106 : vector<1x8x8xf32>
    %cst_30 = arith.constant dense<0xFF800000> : vector<1x8xf32>
    %108 = vector.multi_reduction <maximumf>, %107, %cst_30 [2] : vector<1x8x8xf32> to vector<1x8xf32>
    %109 = vector.shape_cast %108 : vector<1x8xf32> to vector<1x8x1xf32>
    %110 = vector.broadcast %109 : vector<1x8x1xf32> to vector<1x8x8xf32>
    %111 = arith.subf %107, %110 : vector<1x8x8xf32>
    %112 = math.exp %111 : vector<1x8x8xf32>
    %cst_31 = arith.constant dense<0.000000e+00> : vector<1x8xf32>
    %113 = vector.multi_reduction <add>, %112, %cst_31 [2] : vector<1x8x8xf32> to vector<1x8xf32>
    %114 = vector.shape_cast %113 : vector<1x8xf32> to vector<1x8x1xf32>
    %115 = tpu.reciprocal %114 {approx = true} : vector<1x8x1xf32> -> vector<1x8x1xf32>
    %116 = vector.broadcast %115 : vector<1x8x1xf32> to vector<1x8x8xf32>
    %117 = arith.mulf %112, %116 : vector<1x8x8xf32>
    %118 = arith.truncf %117 : vector<1x8x8xf32> to vector<1x8x8xbf16>
    %119 = vector.extract_strided_slice %40 {offsets = [0, 0, 48], sizes = [1, 8, 16], strides = [1, 1, 1]} : vector<1x8x128xbf16> to vector<1x8x16xbf16>
    "tpu.trace_start"() <{level = 10 : i32, message = "bnm,bmd->bnd"}> : () -> ()
    %cst_32 = arith.constant dense<0.000000e+00> : vector<1x8x16xf32>
    %120 = tpu.matmul %118, %119, %cst_32 {dimension_numbers = #tpu.dot_dimension_numbers<[2], [1], [1], [2], [0, 0, 0, 1, 1, 2], [0], [0]>} : vector<1x8x8xbf16>, vector<1x8x16xbf16>, vector<1x8x16xf32> -> vector<1x8x16xf32>
    %cst_33 = arith.constant 0.000000e+00 : f32
    "tpu.trace_stop"() : () -> ()
    %121 = vector.broadcast %cst_33 : f32 to vector<1x8x64xf32>
    %122 = tpu.concatenate %60, %80, %100, %120, %121 in 2 : vector<1x8x16xf32>, vector<1x8x16xf32>, vector<1x8x16xf32>, vector<1x8x16xf32>, vector<1x8x64xf32> -> vector<1x8x128xf32>
    %123 = vector.shape_cast %122 : vector<1x8x128xf32> to vector<8x128xf32>
    %124 = arith.truncf %123 : vector<8x128xf32> to vector<8x128xbf16>
    %c0_34 = arith.constant 0 : index
    %c0_35 = arith.constant 0 : index
    %125 = vector.load %arg5[%c0_34, %c0_35] : memref<128x128xbf16, #tpu.memory_space<vmem>>, vector<128x128xbf16>
    %cst_36 = arith.constant dense<0.000000e+00> : vector<8x128xf32>
    %126 = tpu.matmul %124, %125, %cst_36 {dimension_numbers = #tpu.dot_dimension_numbers<[1], [0], [0], [1], [0, 0, 1, 1], [], []>} : vector<8x128xbf16>, vector<128x128xbf16>, vector<8x128xf32> -> vector<8x128xf32>
    %127 = arith.addf %1, %126 : vector<8x128xf32>
    %c0_37 = arith.constant 0 : index
    %c0_38 = arith.constant 0 : index
    %128 = vector.load %arg6[%c0_37, %c0_38] : memref<1x128xf32, #tpu.memory_space<vmem>>, vector<1x128xf32>
    %129 = vector.broadcast %128 : vector<1x128xf32> to vector<8x128xf32>
    %130 = arith.addf %127, %129 : vector<8x128xf32>
    %c0_39 = arith.constant 0 : index
    %c0_40 = arith.constant 0 : index
    %131 = vector.load %arg7[%c0_39, %c0_40] : memref<1x128xf32, #tpu.memory_space<vmem>>, vector<1x128xf32>
    %c0_41 = arith.constant 0 : index
    %c0_42 = arith.constant 0 : index
    %132 = vector.load %arg8[%c0_41, %c0_42] : memref<1x128xf32, #tpu.memory_space<vmem>>, vector<1x128xf32>
    %cst_43 = arith.constant dense<0.000000e+00> : vector<8xf32>
    %133 = vector.multi_reduction <add>, %130, %cst_43 [1] : vector<8x128xf32> to vector<8xf32>
    %134 = vector.shape_cast %133 : vector<8xf32> to vector<8x1xf32>
    %cst_44 = arith.constant 3.200000e+01 : f32
    %135 = vector.broadcast %cst_44 : f32 to vector<8x1xf32>
    %136 = arith.divf %134, %135 : vector<8x1xf32>
    %137 = vector.broadcast %136 : vector<8x1xf32> to vector<8x128xf32>
    %138 = arith.subf %130, %137 : vector<8x128xf32>
    %139 = tpu.iota {dimensions = array<i32: 1>} : vector<1x128xi32>
    %c32_i32_45 = arith.constant 32 : i32
    %140 = vector.broadcast %c32_i32_45 : i32 to vector<1x128xi32>
    %141 = arith.cmpi slt, %139, %140 : vector<1x128xi32>
    %142 = arith.extui %141 : vector<1x128xi1> to vector<1x128xi32>
    %143 = arith.sitofp %142 : vector<1x128xi32> to vector<1x128xf32>
    %144 = vector.broadcast %143 : vector<1x128xf32> to vector<8x128xf32>
    %145 = arith.mulf %138, %144 : vector<8x128xf32>
    %146 = arith.mulf %145, %145 : vector<8x128xf32>
    %cst_46 = arith.constant dense<0.000000e+00> : vector<8xf32>
    %147 = vector.multi_reduction <add>, %146, %cst_46 [1] : vector<8x128xf32> to vector<8xf32>
    %148 = vector.shape_cast %147 : vector<8xf32> to vector<8x1xf32>
    %cst_47 = arith.constant 3.200000e+01 : f32
    %149 = vector.broadcast %cst_47 : f32 to vector<8x1xf32>
    %150 = arith.divf %148, %149 : vector<8x1xf32>
    %cst_48 = arith.constant 9.99999974E-6 : f32
    %151 = vector.broadcast %cst_48 : f32 to vector<8x1xf32>
    %152 = arith.addf %150, %151 : vector<8x1xf32>
    %153 = math.rsqrt %152 : vector<8x1xf32>
    %154 = vector.broadcast %153 : vector<8x1xf32> to vector<8x128xf32>
    %155 = arith.mulf %145, %154 : vector<8x128xf32>
    %156 = vector.broadcast %131 : vector<1x128xf32> to vector<8x128xf32>
    %157 = arith.mulf %155, %156 : vector<8x128xf32>
    %158 = vector.broadcast %132 : vector<1x128xf32> to vector<8x128xf32>
    %159 = arith.addf %157, %158 : vector<8x128xf32>
    %160 = arith.truncf %159 : vector<8x128xf32> to vector<8x128xbf16>
    %c0_49 = arith.constant 0 : index
    %c0_50 = arith.constant 0 : index
    %161 = vector.load %arg9[%c0_49, %c0_50] : memref<128x128xbf16, #tpu.memory_space<vmem>>, vector<128x128xbf16>
    %cst_51 = arith.constant dense<0.000000e+00> : vector<8x128xf32>
    %162 = tpu.matmul %160, %161, %cst_51 {dimension_numbers = #tpu.dot_dimension_numbers<[1], [0], [0], [1], [0, 0, 1, 1], [], []>} : vector<8x128xbf16>, vector<128x128xbf16>, vector<8x128xf32> -> vector<8x128xf32>
    %c0_52 = arith.constant 0 : index
    %c0_53 = arith.constant 0 : index
    %163 = vector.load %arg10[%c0_52, %c0_53] : memref<1x128xf32, #tpu.memory_space<vmem>>, vector<1x128xf32>
    %164 = vector.broadcast %163 : vector<1x128xf32> to vector<8x128xf32>
    %165 = arith.addf %162, %164 : vector<8x128xf32>
    %cst_54 = arith.constant 5.000000e-01 : f32
    %166 = vector.broadcast %cst_54 : f32 to vector<8x128xf32>
    %167 = arith.mulf %166, %165 : vector<8x128xf32>
    %168 = arith.mulf %165, %165 : vector<8x128xf32>
    %169 = arith.mulf %168, %165 : vector<8x128xf32>
    %cst_55 = arith.constant 4.471500e-02 : f32
    %170 = vector.broadcast %cst_55 : f32 to vector<8x128xf32>
    %171 = arith.mulf %170, %169 : vector<8x128xf32>
    %172 = arith.addf %165, %171 : vector<8x128xf32>
    %cst_56 = arith.constant 0.797884583 : f32
    %173 = vector.broadcast %cst_56 : f32 to vector<8x128xf32>
    %174 = arith.mulf %173, %172 : vector<8x128xf32>
    %175 = math.tanh %174 : vector<8x128xf32>
    %cst_57 = arith.constant 1.000000e+00 : f32
    %176 = vector.broadcast %cst_57 : f32 to vector<8x128xf32>
    %177 = arith.addf %176, %175 : vector<8x128xf32>
    %178 = arith.mulf %167, %177 : vector<8x128xf32>
    %179 = arith.truncf %178 : vector<8x128xf32> to vector<8x128xbf16>
    %c0_58 = arith.constant 0 : index
    %c0_59 = arith.constant 0 : index
    %180 = vector.load %arg11[%c0_58, %c0_59] : memref<128x128xbf16, #tpu.memory_space<vmem>>, vector<128x128xbf16>
    %cst_60 = arith.constant dense<0.000000e+00> : vector<8x128xf32>
    %181 = tpu.matmul %179, %180, %cst_60 {dimension_numbers = #tpu.dot_dimension_numbers<[1], [0], [0], [1], [0, 0, 1, 1], [], []>} : vector<8x128xbf16>, vector<128x128xbf16>, vector<8x128xf32> -> vector<8x128xf32>
    %c0_61 = arith.constant 0 : index
    %c0_62 = arith.constant 0 : index
    %182 = vector.load %arg12[%c0_61, %c0_62] : memref<1x128xf32, #tpu.memory_space<vmem>>, vector<1x128xf32>
    %183 = vector.broadcast %182 : vector<1x128xf32> to vector<8x128xf32>
    %184 = arith.addf %181, %183 : vector<8x128xf32>
    %185 = arith.addf %130, %184 : vector<8x128xf32>
    %186 = vector.shape_cast %185 : vector<8x128xf32> to vector<1x8x128xf32>
    %c0_63 = arith.constant 0 : index
    %c0_64 = arith.constant 0 : index
    %c0_65 = arith.constant 0 : index
    %187 = vector.load %arg13[%c0_63, %c0_64, %c0_65] : memref<1x8x128xf32, #tpu.memory_space<vmem>>, vector<1x8x128xf32>
    tpu.vector_store %arg13[%c0_63, %c0_64, %c0_65], %186 {strides = array<i32>} : memref<1x8x128xf32, #tpu.memory_space<vmem>>, vector<1x8x128xf32>,
    return
  }
  func.func @transform_0(%arg0: i32) -> (i32, i32, i32) {
    %c0_i32 = arith.constant 0 : i32
    %c0_i32_0 = arith.constant 0 : i32
    %c0_i32_1 = arith.constant 0 : i32
    return %arg0, %c0_i32, %c0_i32_0 : i32, i32, i32
  }
  func.func @transform_1(%arg0: i32) -> (i32, i32) {
    %c0_i32 = arith.constant 0 : i32
    %c0_i32_0 = arith.constant 0 : i32
    %c0_i32_1 = arith.constant 0 : i32
    return %c0_i32, %c0_i32_0 : i32, i32
  }
  func.func @transform_2(%arg0: i32) -> (i32, i32) {
    %c0_i32 = arith.constant 0 : i32
    %c0_i32_0 = arith.constant 0 : i32
    %c0_i32_1 = arith.constant 0 : i32
    return %c0_i32, %c0_i32_0 : i32, i32
  }
  func.func @transform_3(%arg0: i32) -> (i32, i32) {
    %c0_i32 = arith.constant 0 : i32
    %c0_i32_0 = arith.constant 0 : i32
    %c0_i32_1 = arith.constant 0 : i32
    return %c0_i32, %c0_i32_0 : i32, i32
  }
  func.func @transform_4(%arg0: i32) -> (i32, i32) {
    %c0_i32 = arith.constant 0 : i32
    %c0_i32_0 = arith.constant 0 : i32
    %c0_i32_1 = arith.constant 0 : i32
    return %c0_i32, %c0_i32_0 : i32, i32
  }
  func.func @transform_5(%arg0: i32) -> (i32, i32) {
    %c0_i32 = arith.constant 0 : i32
    %c0_i32_0 = arith.constant 0 : i32
    %c0_i32_1 = arith.constant 0 : i32
    return %c0_i32, %c0_i32_0 : i32, i32
  }
  func.func @transform_6(%arg0: i32) -> (i32, i32) {
    %c0_i32 = arith.constant 0 : i32
    %c0_i32_0 = arith.constant 0 : i32
    %c0_i32_1 = arith.constant 0 : i32
    return %c0_i32, %c0_i32_0 : i32, i32
  }
  func.func @transform_7(%arg0: i32) -> (i32, i32) {
    %c0_i32 = arith.constant 0 : i32
    %c0_i32_0 = arith.constant 0 : i32
    %c0_i32_1 = arith.constant 0 : i32
    return %c0_i32, %c0_i32_0 : i32, i32
  }
  func.func @transform_8(%arg0: i32) -> (i32, i32) {
    %c0_i32 = arith.constant 0 : i32
    %c0_i32_0 = arith.constant 0 : i32
    %c0_i32_1 = arith.constant 0 : i32
    return %c0_i32, %c0_i32_0 : i32, i32
  }
  func.func @transform_9(%arg0: i32) -> (i32, i32) {
    %c0_i32 = arith.constant 0 : i32
    %c0_i32_0 = arith.constant 0 : i32
    %c0_i32_1 = arith.constant 0 : i32
    return %c0_i32, %c0_i32_0 : i32, i32
  }
  func.func @transform_10(%arg0: i32) -> (i32, i32) {
    %c0_i32 = arith.constant 0 : i32
    %c0_i32_0 = arith.constant 0 : i32
    %c0_i32_1 = arith.constant 0 : i32
    return %c0_i32, %c0_i32_0 : i32, i32
  }
  func.func @transform_11(%arg0: i32) -> (i32, i32) {
    %c0_i32 = arith.constant 0 : i32
    %c0_i32_0 = arith.constant 0 : i32
    %c0_i32_1 = arith.constant 0 : i32
    return %c0_i32, %c0_i32_0 : i32, i32
  }
  func.func @transform_12(%arg0: i32) -> (i32, i32, i32) {
    %c0_i32 = arith.constant 0 : i32
    %c0_i32_0 = arith.constant 0 : i32
    %c0_i32_1 = arith.constant 0 : i32
    return %arg0, %c0_i32, %c0_i32_0 : i32, i32, i32
  }
}

</mosaic_0001>

<llo_original>
// kernel: tpu_custom_call.1
$region0: #{tpu_custom_call.1}
  #allocation0 [shape = 'u32[]', space=smem, size = 0x4, offset = 0x4, fixed_abs, tag = 'smem constant byte address 0x4 - core index']
  #allocation1 [shape = 'u32[72,128]{1,0:T(1,128)}', space=vmem, size = 0x9000, scoped, tag = 'internal scratch']
  %s0 = inlined_call_operand.hbm [shape: f32[2,8,128], index: 0, kind: input, shape index: {}]
  %s1 = inlined_call_operand.hbm [shape: f32[1,128], index: 1, kind: input, shape index: {}]
  %s2 = inlined_call_operand.vmem [shape: f32[1,128], index: 2, kind: input, shape index: {}]
  %s3 = inlined_call_operand.hbm [shape: bf16[128,384], index: 3, kind: input, shape index: {}]
  %s4 = inlined_call_operand.hbm [shape: bf16[128,128], index: 4, kind: input, shape index: {}]
  %s5 = inlined_call_operand.vmem [shape: f32[1,128], index: 5, kind: input, shape index: {}]
  %s6 = inlined_call_operand.vmem [shape: f32[1,128], index: 6, kind: input, shape index: {}]
  %s7 = inlined_call_operand.vmem [shape: f32[1,128], index: 7, kind: input, shape index: {}]
  %s8 = inlined_call_operand.hbm [shape: bf16[128,128], index: 8, kind: input, shape index: {}]
  %s9 = inlined_call_operand.vmem [shape: f32[1,128], index: 9, kind: input, shape index: {}]
  %s10 = inlined_call_operand.hbm [shape: bf16[128,128], index: 10, kind: input, shape index: {}]
  %s11 = inlined_call_operand.vmem [shape: f32[1,128], index: 11, kind: input, shape index: {}]
  %s12 = inlined_call_operand.hbm [shape: f32[2,8,128], index: 12, kind: output, shape index: {}]
  %s13 = sld [smem:[#allocation0]]
  $region105: #{tpu_custom_call.1} parent=0
    _
  %s15 = ssub.s32 1, %s13
  %s16 = scalar_select 0, %s15, %s13
  $region1: #{tpu_custom_call.1} parent=0
    #allocation2 [shape = 'u8[8192]{0}', space=vmem, size = 0x2000, scoped, tag = 'input window, operand 0']
    #allocation3 [shape = 's32[2]{0}', space=sflag, size = 0x8, scoped, tag = 'scoped memory for tpu_custom_call.1']
    #allocation4 [shape = 's32[2]{0}', space=sflag, size = 0x8, scoped, tag = 'scoped memory for tpu_custom_call.1']
    #allocation5 [shape = 'u8[512]{0}', space=vmem, size = 0x400, scoped, tag = 'input window, operand 1, single buffered']
    #allocation6 [shape = 's32[1]{0}', space=sflag, size = 0x4, scoped, tag = 'scoped memory for tpu_custom_call.1']
    #allocation7 [shape = 'u8[98304]{0}', space=vmem, size = 0x18000, scoped, tag = 'input window, operand 3, single buffered']
    #allocation8 [shape = 'u8[32768]{0}', space=vmem, size = 0x8000, scoped, tag = 'input window, operand 4, single buffered']
    #allocation9 [shape = 's32[1]{0}', space=sflag, size = 0x4, scoped, tag = 'scoped memory for tpu_custom_call.1']
    #allocation10 [shape = 'u8[32768]{0}', space=vmem, size = 0x8000, scoped, tag = 'input window, operand 8, single buffered']
    #allocation11 [shape = 'u8[32768]{0}', space=vmem, size = 0x8000, scoped, tag = 'input window, operand 10, single buffered']
    #allocation12 [shape = 's32[1]{0}', space=sflag, size = 0x4, scoped, tag = 'scoped memory for tpu_custom_call.1']
    #allocation13 [shape = 'u8[8192]{0}', space=vmem, size = 0x2000, scoped, tag = 'output window, operand 0']
    %17 = vsyncpa [#allocation3], 0
    %s18 = scalar_lea.sflag [#allocation3], 1
    %19 = vsyncpa %s18, 0
    %20 = vsyncpa [#allocation6], 0
    %21 = vsyncpa [#allocation9], 0
    %22 = vsyncpa [#allocation12], 0
    %23 = vsyncpa [#allocation4], 0
    %s24 = scalar_lea.sflag [#allocation4], 1
    %25 = vsyncpa %s24, 0
    loop: start=0, step=1, limit=4
    $region2: #{tpu_custom_call.1} parent=1 // loop_pre_header
      _
    $region3: #{tpu_custom_call.1} parent=1 // loop_header
      %s27 = sphi 0, %s31
      %p28 = scmp.ge.s32.totalorder %s27, 4
      %s37 = sphi 0, %s39
      %s40 = sphi 0, %s37
      %s41 = sphi 0, %s40
      %s57 = sphi 0, %s41
      %s61 = sphi 0, %s61
      %s63 = sphi 0, %s61
      %s64 = sphi 0, %s63
      %s78 = sphi 0, %s64
      %s82 = sphi 0, %s82
      %s84 = sphi 0, %s82
      %s85 = sphi 0, %s84
      %s99 = sphi 0, %s85
      %s103 = sphi 0, %s103
      %s105 = sphi 0, %s103
      %s106 = sphi 0, %s105
      %s120 = sphi 0, %s106
      %s124 = sphi 0, %s124
      %s126 = sphi 0, %s124
      %s127 = sphi 0, %s126
      %s141 = sphi 0, %s127
      %s145 = sphi 0, %s145
      %s147 = sphi 0, %s145
      %s148 = sphi 0, %s147
      %s162 = sphi 0, %s148
      %s166 = sphi 0, %s166
      %s168 = sphi 0, %s166
      %s169 = sphi 0, %s168
      %s183 = sphi 0, %s169
      %s187 = sphi 0, %s187
      %s189 = sphi 0, %s187
      %s190 = sphi 0, %s189
      %s204 = sphi 0, %s190
      %s208 = sphi 0, %s208
      %s210 = sphi 0, %s208
      %s211 = sphi 0, %s210
      %s225 = sphi 0, %s211
      %s229 = sphi 0, %s229
      %s231 = sphi 0, %s229
      %s232 = sphi 0, %s231
      %s246 = sphi 0, %s232
      %s250 = sphi 0, %s250
      %s252 = sphi 0, %s250
      %s253 = sphi 0, %s252
      %s267 = sphi 0, %s253
      %s271 = sphi 0, %s271
      %s273 = sphi 0, %s271
      %s274 = sphi 0, %s273
      %s288 = sphi 0, %s274
      %s294 = sphi 0, %s296
      %s297 = sphi 0, %s294
      %s298 = sphi 0, %s297
      %s314 = sphi 0, %s298
    $region4: #{tpu_custom_call.1} parent=1 // loop_header_branch
      %30 = sbr.rel (%p28) target = $region8
    $region5: #{tpu_custom_call.1} parent=1 // loop_body
      %s32 = ssub.s32 %s27, 1
      %s33 = ssub.s32 %s27, 2
      %s34 = sadd.s32 %s27, 1
      %s35 = ssub.s32 %s27, %s34
      %p36 = scmp.eq.s32.totalorder %s35, 0
      %s38 = sadd.s32 %s37, 1
      %s39 = scalar_select %p36, %s37, %s38
      %p42 = pneg %p36
      %p43 = scmp.eq.s32.totalorder %s27, 1
      %p44 = por %p42, %p43
      %p45 = scmp.ne.s32.totalorder %s37, %s40
      %p46 = scmp.eq.s32.totalorder %s27, 0
      %p47 = por %p45, %p46
      %p48 = scmp.ne.s32.totalorder %s37, %s40
      %p49 = scmp.eq.s32.totalorder %s32, 1
      %p50 = por %p48, %p49
      %p51 = scmp.ne.s32.totalorder %s40, %s41
      %p52 = scmp.eq.s32.totalorder %s32, 0
      %p53 = por %p51, %p52
      %p54 = scmp.ne.s32.totalorder %s40, %s41
      %p55 = scmp.eq.s32.totalorder %s33, 1
      %p56 = por %p54, %p55
      %p58 = scmp.ne.s32.totalorder %s41, %s57
      %p59 = scmp.eq.s32.totalorder %s33, 0
      %p60 = por %p58, %p59
      %s62 = sadd.s32 %s61, 1
      %p65 = scmp.eq.s32.totalorder %s27, 1
      %p66 = scmp.ne.s32.totalorder %s61, %s63
      %p67 = scmp.eq.s32.totalorder %s27, 0
      %p68 = por %p66, %p67
      %p69 = scmp.ne.s32.totalorder %s61, %s63
      %p70 = scmp.eq.s32.totalorder %s32, 1
      %p71 = por %p69, %p70
      %p72 = scmp.ne.s32.totalorder %s63, %s64
      %p73 = scmp.eq.s32.totalorder %s32, 0
      %p74 = por %p72, %p73
      %p75 = scmp.ne.s32.totalorder %s63, %s64
      %p76 = scmp.eq.s32.totalorder %s33, 1
      %p77 = por %p75, %p76
      %p79 = scmp.ne.s32.totalorder %s64, %s78
      %p80 = scmp.eq.s32.totalorder %s33, 0
      %p81 = por %p79, %p80
      %s83 = sadd.s32 %s82, 1
      %p86 = scmp.eq.s32.totalorder %s27, 1
      %p87 = scmp.ne.s32.totalorder %s82, %s84
      %p88 = scmp.eq.s32.totalorder %s27, 0
      %p89 = por %p87, %p88
      %p90 = scmp.ne.s32.totalorder %s82, %s84
      %p91 = scmp.eq.s32.totalorder %s32, 1
      %p92 = por %p90, %p91
      %p93 = scmp.ne.s32.totalorder %s84, %s85
      %p94 = scmp.eq.s32.totalorder %s32, 0
      %p95 = por %p93, %p94
      %p96 = scmp.ne.s32.totalorder %s84, %s85
      %p97 = scmp.eq.s32.totalorder %s33, 1
      %p98 = por %p96, %p97
      %p100 = scmp.ne.s32.totalorder %s85, %s99
      %p101 = scmp.eq.s32.totalorder %s33, 0
      %p102 = por %p100, %p101
      %s104 = sadd.s32 %s103, 1
      %p107 = scmp.eq.s32.totalorder %s27, 1
      %p108 = scmp.ne.s32.totalorder %s103, %s105
      %p109 = scmp.eq.s32.totalorder %s27, 0
      %p110 = por %p108, %p109
      %p111 = scmp.ne.s32.totalorder %s103, %s105
      %p112 = scmp.eq.s32.totalorder %s32, 1
      %p113 = por %p111, %p112
      %p114 = scmp.ne.s32.totalorder %s105, %s106
      %p115 = scmp.eq.s32.totalorder %s32, 0
      %p116 = por %p114, %p115
      %p117 = scmp.ne.s32.totalorder %s105, %s106
      %p118 = scmp.eq.s32.totalorder %s33, 1
      %p119 = por %p117, %p118
      %p121 = scmp.ne.s32.totalorder %s106, %s120
      %p122 = scmp.eq.s32.totalorder %s33, 0
      %p123 = por %p121, %p122
      %s125 = sadd.s32 %s124, 1
      %p128 = scmp.eq.s32.totalorder %s27, 1
      %p129 = scmp.ne.s32.totalorder %s124, %s126
      %p130 = scmp.eq.s32.totalorder %s27, 0
      %p131 = por %p129, %p130
      %p132 = scmp.ne.s32.totalorder %s124, %s126
      %p133 = scmp.eq.s32.totalorder %s32, 1
      %p134 = por %p132, %p133
      %p135 = scmp.ne.s32.totalorder %s126, %s127
      %p136 = scmp.eq.s32.totalorder %s32, 0
      %p137 = por %p135, %p136
      %p138 = scmp.ne.s32.totalorder %s126, %s127
      %p139 = scmp.eq.s32.totalorder %s33, 1
      %p140 = por %p138, %p139
      %p142 = scmp.ne.s32.totalorder %s127, %s141
      %p143 = scmp.eq.s32.totalorder %s33, 0
      %p144 = por %p142, %p143
      %s146 = sadd.s32 %s145, 1
      %p149 = scmp.eq.s32.totalorder %s27, 1
      %p150 = scmp.ne.s32.totalorder %s145, %s147
      %p151 = scmp.eq.s32.totalorder %s27, 0
      %p152 = por %p150, %p151
      %p153 = scmp.ne.s32.totalorder %s145, %s147
      %p154 = scmp.eq.s32.totalorder %s32, 1
      %p155 = por %p153, %p154
      %p156 = scmp.ne.s32.totalorder %s147, %s148
      %p157 = scmp.eq.s32.totalorder %s32, 0
      %p158 = por %p156, %p157
      %p159 = scmp.ne.s32.totalorder %s147, %s148
      %p160 = scmp.eq.s32.totalorder %s33, 1
      %p161 = por %p159, %p160
      %p163 = scmp.ne.s32.totalorder %s148, %s162
      %p164 = scmp.eq.s32.totalorder %s33, 0
      %p165 = por %p163, %p164
      %s167 = sadd.s32 %s166, 1
      %p170 = scmp.eq.s32.totalorder %s27, 1
      %p171 = scmp.ne.s32.totalorder %s166, %s168
      %p172 = scmp.eq.s32.totalorder %s27, 0
      %p173 = por %p171, %p172
      %p174 = scmp.ne.s32.totalorder %s166, %s168
      %p175 = scmp.eq.s32.totalorder %s32, 1
      %p176 = por %p174, %p175
      %p177 = scmp.ne.s32.totalorder %s168, %s169
      %p178 = scmp.eq.s32.totalorder %s32, 0
      %p179 = por %p177, %p178
      %p180 = scmp.ne.s32.totalorder %s168, %s169
      %p181 = scmp.eq.s32.totalorder %s33, 1
      %p182 = por %p180, %p181
      %p184 = scmp.ne.s32.totalorder %s169, %s183
      %p185 = scmp.eq.s32.totalorder %s33, 0
      %p186 = por %p184, %p185
      %s188 = sadd.s32 %s187, 1
      %p191 = scmp.eq.s32.totalorder %s27, 1
      %p192 = scmp.ne.s32.totalorder %s187, %s189
      %p193 = scmp.eq.s32.totalorder %s27, 0
      %p194 = por %p192, %p193
      %p195 = scmp.ne.s32.totalorder %s187, %s189
      %p196 = scmp.eq.s32.totalorder %s32, 1
      %p197 = por %p195, %p196
      %p198 = scmp.ne.s32.totalorder %s189, %s190
      %p199 = scmp.eq.s32.totalorder %s32, 0
      %p200 = por %p198, %p199
      %p201 = scmp.ne.s32.totalorder %s189, %s190
      %p202 = scmp.eq.s32.totalorder %s33, 1
      %p203 = por %p201, %p202
      %p205 = scmp.ne.s32.totalorder %s190, %s204
      %p206 = scmp.eq.s32.totalorder %s33, 0
      %p207 = por %p205, %p206
      %s209 = sadd.s32 %s208, 1
      %p212 = scmp.eq.s32.totalorder %s27, 1
      %p213 = scmp.ne.s32.totalorder %s208, %s210
      %p214 = scmp.eq.s32.totalorder %s27, 0
      %p215 = por %p213, %p214
      %p216 = scmp.ne.s32.totalorder %s208, %s210
      %p217 = scmp.eq.s32.totalorder %s32, 1
      %p218 = por %p216, %p217
      %p219 = scmp.ne.s32.totalorder %s210, %s211
      %p220 = scmp.eq.s32.totalorder %s32, 0
      %p221 = por %p219, %p220
      %p222 = scmp.ne.s32.totalorder %s210, %s211
      %p223 = scmp.eq.s32.totalorder %s33, 1
      %p224 = por %p222, %p223
      %p226 = scmp.ne.s32.totalorder %s211, %s225
      %p227 = scmp.eq.s32.totalorder %s33, 0
      %p228 = por %p226, %p227
      %s230 = sadd.s32 %s229, 1
      %p233 = scmp.eq.s32.totalorder %s27, 1
      %p234 = scmp.ne.s32.totalorder %s229, %s231
      %p235 = scmp.eq.s32.totalorder %s27, 0
      %p236 = por %p234, %p235
      %p237 = scmp.ne.s32.totalorder %s229, %s231
      %p238 = scmp.eq.s32.totalorder %s32, 1
      %p239 = por %p237, %p238
      %p240 = scmp.ne.s32.totalorder %s231, %s232
      %p241 = scmp.eq.s32.totalorder %s32, 0
      %p242 = por %p240, %p241
      %p243 = scmp.ne.s32.totalorder %s231, %s232
      %p244 = scmp.eq.s32.totalorder %s33, 1
      %p245 = por %p243, %p244
      %p247 = scmp.ne.s32.totalorder %s232, %s246
      %p248 = scmp.eq.s32.totalorder %s33, 0
      %p249 = por %p247, %p248
      %s251 = sadd.s32 %s250, 1
      %p254 = scmp.eq.s32.totalorder %s27, 1
      %p255 = scmp.ne.s32.totalorder %s250, %s252
      %p256 = scmp.eq.s32.totalorder %s27, 0
      %p257 = por %p255, %p256
      %p258 = scmp.ne.s32.totalorder %s250, %s252
      %p259 = scmp.eq.s32.totalorder %s32, 1
      %p260 = por %p258, %p259
      %p261 = scmp.ne.s32.totalorder %s252, %s253
      %p262 = scmp.eq.s32.totalorder %s32, 0
      %p263 = por %p261, %p262
      %p264 = scmp.ne.s32.totalorder %s252, %s253
      %p265 = scmp.eq.s32.totalorder %s33, 1
      %p266 = por %p264, %p265
      %p268 = scmp.ne.s32.totalorder %s253, %s267
      %p269 = scmp.eq.s32.totalorder %s33, 0
      %p270 = por %p268, %p269
      %s272 = sadd.s32 %s271, 1
      %p275 = scmp.eq.s32.totalorder %s27, 1
      %p276 = scmp.ne.s32.totalorder %s271, %s273
      %p277 = scmp.eq.s32.totalorder %s27, 0
      %p278 = por %p276, %p277
      %p279 = scmp.ne.s32.totalorder %s271, %s273
      %p280 = scmp.eq.s32.totalorder %s32, 1
      %p281 = por %p279, %p280
      %p282 = scmp.ne.s32.totalorder %s273, %s274
      %p283 = scmp.eq.s32.totalorder %s32, 0
      %p284 = por %p282, %p283
      %p285 = scmp.ne.s32.totalorder %s273, %s274
      %p286 = scmp.eq.s32.totalorder %s33, 1
      %p287 = por %p285, %p286
      %p289 = scmp.ne.s32.totalorder %s274, %s288
      %p290 = scmp.eq.s32.totalorder %s33, 0
      %p291 = por %p289, %p290
      %s292 = ssub.s32 %s27, %s34
      %p293 = scmp.eq.s32.totalorder %s292, 0
      %s295 = sadd.s32 %s294, 1
      %s296 = scalar_select %p293, %s294, %s295
      %p299 = pneg %p293
      %p300 = scmp.eq.s32.totalorder %s27, 1
      %p301 = por %p299, %p300
      %p302 = scmp.ne.s32.totalorder %s294, %s297
      %p303 = scmp.eq.s32.totalorder %s27, 0
      %p304 = por %p302, %p303
      %p305 = scmp.ne.s32.totalorder %s294, %s297
      %p306 = scmp.eq.s32.totalorder %s32, 1
      %p307 = por %p305, %p306
      %p308 = scmp.ne.s32.totalorder %s297, %s298
      %p309 = scmp.eq.s32.totalorder %s32, 0
      %p310 = por %p308, %p309
      %p311 = scmp.ne.s32.totalorder %s297, %s298
      %p312 = scmp.eq.s32.totalorder %s33, 1
      %p313 = por %p311, %p312
      %p315 = scmp.ne.s32.totalorder %s298, %s314
      %p316 = scmp.eq.s32.totalorder %s33, 0
      %p317 = por %p315, %p316
      %p318 = scmp.le.s32.totalorder 1, %s27
      %p319 = scmp.lt.s32.totalorder %s27, 3
      %p320 = pnand %p318, %p319
      %p321 = pneg %p320
      // Predicated region
      $region9: #{tpu_custom_call.1} parent=5 // pred_check
        _
      $region10: #{tpu_custom_call.1} parent=5 // pred_check_branch
        %323 = sbr.rel (%p320) target = $region12
      $region11: #{tpu_custom_call.1} parent=5 // pred_region
        %s324 = ssub.s32 %s27, 1
        // Predicated region
        $region13: #{tpu_custom_call.1} parent=11 // pred_check
          %p325 = pneg %p74
        $region14: #{tpu_custom_call.1} parent=11 // pred_check_branch
          %327 = sbr.rel (%p325) target = $region16
        $region15: #{tpu_custom_call.1} parent=11 // pred_region
          %329 = vsyncadd [#allocation6], 0
          %s331 = sshll.u32 %s1, 4
          %s332 = int_to_ptr.hbm [resolvable:$true] %s331
          %s333 = sshll.u32 [#allocation5], 4
          %s334 = int_to_ptr.vmem [resolvable:$true] %s333
          %336 = dma.hbm_to_vmem [thread:$0]  %s332, 16, %s334, [#allocation6]
        $region16: #{tpu_custom_call.1} parent=11 // pred_fallthru
          _
        // Predicated region
        $region17: #{tpu_custom_call.1} parent=11 // pred_check
          %p337 = pneg %p95
        $region18: #{tpu_custom_call.1} parent=11 // pred_check_branch
          %339 = sbr.rel (%p337) target = $region20
        $region19: #{tpu_custom_call.1} parent=11 // pred_region
          _
        $region20: #{tpu_custom_call.1} parent=11 // pred_fallthru
          _
        // Predicated region
        $region21: #{tpu_custom_call.1} parent=11 // pred_check
          %p340 = pneg %p116
        $region22: #{tpu_custom_call.1} parent=11 // pred_check_branch
          %342 = sbr.rel (%p340) target = $region24
        $region23: #{tpu_custom_call.1} parent=11 // pred_region
          %344 = vsyncadd [#allocation6], 0
          %s345 = sshll.u32 %s3, 4
          %s346 = int_to_ptr.hbm [resolvable:$true] %s345
          %s347 = sshll.u32 [#allocation7], 4
          %s348 = int_to_ptr.vmem [resolvable:$true] %s347
          %353 = dma.hbm_to_vmem [thread:$0]  %s346, 3072, %s348, [#allocation6], 192, 192, 12
        $region24: #{tpu_custom_call.1} parent=11 // pred_fallthru
          _
        // Predicated region
        $region25: #{tpu_custom_call.1} parent=11 // pred_check
          %p354 = pneg %p137
        $region26: #{tpu_custom_call.1} parent=11 // pred_check_branch
          %356 = sbr.rel (%p354) target = $region28
        $region27: #{tpu_custom_call.1} parent=11 // pred_region
          %358 = vsyncadd [#allocation9], 0
          %s359 = sshll.u32 %s4, 4
          %s360 = int_to_ptr.hbm [resolvable:$true] %s359
          %s361 = sshll.u32 [#allocation8], 4
          %s362 = int_to_ptr.vmem [resolvable:$true] %s361
          %367 = dma.hbm_to_vmem [thread:$0]  %s360, 1024, %s362, [#allocation9], 64, 64, 4
        $region28: #{tpu_custom_call.1} parent=11 // pred_fallthru
          _
        // Predicated region
        $region29: #{tpu_custom_call.1} parent=11 // pred_check
          %p368 = pneg %p158
        $region30: #{tpu_custom_call.1} parent=11 // pred_check_branch
          %370 = sbr.rel (%p368) target = $region32
        $region31: #{tpu_custom_call.1} parent=11 // pred_region
          _
        $region32: #{tpu_custom_call.1} parent=11 // pred_fallthru
          _
        // Predicated region
        $region33: #{tpu_custom_call.1} parent=11 // pred_check
          %p371 = pneg %p179
        $region34: #{tpu_custom_call.1} parent=11 // pred_check_branch
          %373 = sbr.rel (%p371) target = $region36
        $region35: #{tpu_custom_call.1} parent=11 // pred_region
          _
        $region36: #{tpu_custom_call.1} parent=11 // pred_fallthru
          _
        // Predicated region
        $region37: #{tpu_custom_call.1} parent=11 // pred_check
          %p374 = pneg %p200
        $region38: #{tpu_custom_call.1} parent=11 // pred_check_branch
          %376 = sbr.rel (%p374) target = $region40
        $region39: #{tpu_custom_call.1} parent=11 // pred_region
          _
        $region40: #{tpu_custom_call.1} parent=11 // pred_fallthru
          _
        // Predicated region
        $region41: #{tpu_custom_call.1} parent=11 // pred_check
          %p377 = pneg %p221
        $region42: #{tpu_custom_call.1} parent=11 // pred_check_branch
          %379 = sbr.rel (%p377) target = $region44
        $region43: #{tpu_custom_call.1} parent=11 // pred_region
          %381 = vsyncadd [#allocation9], 0
          %s382 = sshll.u32 %s8, 4
          %s383 = int_to_ptr.hbm [resolvable:$true] %s382
          %s384 = sshll.u32 [#allocation10], 4
          %s385 = int_to_ptr.vmem [resolvable:$true] %s384
          %390 = dma.hbm_to_vmem [thread:$0]  %s383, 1024, %s385, [#allocation9], 64, 64, 4
        $region44: #{tpu_custom_call.1} parent=11 // pred_fallthru
          _
        // Predicated region
        $region45: #{tpu_custom_call.1} parent=11 // pred_check
          %p391 = pneg %p242
        $region46: #{tpu_custom_call.1} parent=11 // pred_check_branch
          %393 = sbr.rel (%p391) target = $region48
        $region47: #{tpu_custom_call.1} parent=11 // pred_region
          _
        $region48: #{tpu_custom_call.1} parent=11 // pred_fallthru
          _
        // Predicated region
        $region49: #{tpu_custom_call.1} parent=11 // pred_check
          %p394 = pneg %p263
        $region50: #{tpu_custom_call.1} parent=11 // pred_check_branch
          %396 = sbr.rel (%p394) target = $region52
        $region51: #{tpu_custom_call.1} parent=11 // pred_region
          %398 = vsyncadd [#allocation12], 0
          %s399 = sshll.u32 %s10, 4
          %s400 = int_to_ptr.hbm [resolvable:$true] %s399
          %s401 = sshll.u32 [#allocation11], 4
          %s402 = int_to_ptr.vmem [resolvable:$true] %s401
          %407 = dma.hbm_to_vmem [thread:$0]  %s400, 1024, %s402, [#allocation12], 64, 64, 4
        $region52: #{tpu_custom_call.1} parent=11 // pred_fallthru
          _
        // Predicated region
        $region53: #{tpu_custom_call.1} parent=11 // pred_check
          %p408 = pneg %p284
        $region54: #{tpu_custom_call.1} parent=11 // pred_check_branch
          %410 = sbr.rel (%p408) target = $region56
        $region55: #{tpu_custom_call.1} parent=11 // pred_region
          _
        $region56: #{tpu_custom_call.1} parent=11 // pred_fallthru
          _
      $region12: #{tpu_custom_call.1} parent=5 // pred_fallthru
        _
      %p411 = scmp.lt.s32.totalorder %s27, 2
      // Predicated region
      $region57: #{tpu_custom_call.1} parent=5 // pred_check
        %p412 = pneg %p411
      $region58: #{tpu_custom_call.1} parent=5 // pred_check_branch
        %414 = sbr.rel (%p412) target = $region60
      $region59: #{tpu_custom_call.1} parent=5 // pred_region
        // Predicated region
        $region61: #{tpu_custom_call.1} parent=59 // pred_check
          %p415 = pneg %p47
        $region62: #{tpu_custom_call.1} parent=59 // pred_check_branch
          %417 = sbr.rel (%p415) target = $region64
        $region63: #{tpu_custom_call.1} parent=59 // pred_region
          %s418 = sand.u32 %s37, 1
          %s419 = scalar_lea.sflag [#allocation3], %s418
          %s420 = sand.u32 %s37, 1
          %s421 = smul.addr %s420, 8
          %s422 = scalar_lea.vmem [#allocation2], %s421
          %424 = vsyncadd %s419, 0
          %s425 = smul.addr %s27, 8
          %s426 = scalar_lea.hbm %s0, %s425
          %s428 = sshll.u32 %s426, 4
          %s429 = int_to_ptr.hbm [resolvable:$true] %s428
          %s430 = sshll.u32 %s422, 4
          %s431 = int_to_ptr.vmem [resolvable:$true] %s430
          %433 = dma.hbm_to_vmem [thread:$0]  %s429, 128, %s431, %s419
        $region64: #{tpu_custom_call.1} parent=59 // pred_fallthru
          _
      $region60: #{tpu_custom_call.1} parent=5 // pred_fallthru
        _
      %p434 = scmp.le.s32.totalorder 1, %s27
      %p435 = scmp.lt.s32.totalorder %s27, 3
      %p436 = pnand %p434, %p435
      %p437 = pneg %p436
      // Predicated region
      $region65: #{tpu_custom_call.1} parent=5 // pred_check
        _
      $region66: #{tpu_custom_call.1} parent=5 // pred_check_branch
        %439 = sbr.rel (%p436) target = $region68
      $region67: #{tpu_custom_call.1} parent=5 // pred_region
        %s440 = ssub.s32 %s27, 1
        %s441 = sand.u32 %s40, 1
        %s442 = scalar_lea.sflag [#allocation3], %s441
        %s443 = sand.u32 %s40, 1
        %s444 = smul.addr %s443, 8
        %s445 = scalar_lea.vmem [#allocation2], %s444
        // Predicated region
        $region69: #{tpu_custom_call.1} parent=67 // pred_check
          %p446 = pneg %p53
        $region70: #{tpu_custom_call.1} parent=67 // pred_check_branch
          %448 = sbr.rel (%p446) target = $region72
        $region71: #{tpu_custom_call.1} parent=67 // pred_region
          %450 = dma.done %s442, 128
        $region72: #{tpu_custom_call.1} parent=67 // pred_fallthru
          _
        // Predicated region
        $region73: #{tpu_custom_call.1} parent=67 // pred_check
          %p451 = pneg %p74
        $region74: #{tpu_custom_call.1} parent=67 // pred_check_branch
          %453 = sbr.rel (%p451) target = $region76
        $region75: #{tpu_custom_call.1} parent=67 // pred_region
          %455 = dma.done [#allocation6], 16
        $region76: #{tpu_custom_call.1} parent=67 // pred_fallthru
          _
        // Predicated region
        $region77: #{tpu_custom_call.1} parent=67 // pred_check
          %p456 = pneg %p116
        $region78: #{tpu_custom_call.1} parent=67 // pred_check_branch
          %458 = sbr.rel (%p456) target = $region80
        $region79: #{tpu_custom_call.1} parent=67 // pred_region
          %460 = dma.done [#allocation6], 3072
        $region80: #{tpu_custom_call.1} parent=67 // pred_fallthru
          _
        // Predicated region
        $region81: #{tpu_custom_call.1} parent=67 // pred_check
          %p461 = pneg %p137
        $region82: #{tpu_custom_call.1} parent=67 // pred_check_branch
          %463 = sbr.rel (%p461) target = $region84
        $region83: #{tpu_custom_call.1} parent=67 // pred_region
          %465 = dma.done [#allocation9], 1024
        $region84: #{tpu_custom_call.1} parent=67 // pred_fallthru
          _
        // Predicated region
        $region85: #{tpu_custom_call.1} parent=67 // pred_check
          %p466 = pneg %p221
        $region86: #{tpu_custom_call.1} parent=67 // pred_check_branch
          %468 = sbr.rel (%p466) target = $region88
        $region87: #{tpu_custom_call.1} parent=67 // pred_region
          %470 = dma.done [#allocation9], 1024
        $region88: #{tpu_custom_call.1} parent=67 // pred_fallthru
          _
        // Predicated region
        $region89: #{tpu_custom_call.1} parent=67 // pred_check
          %p471 = pneg %p263
        $region90: #{tpu_custom_call.1} parent=67 // pred_check_branch
          %473 = sbr.rel (%p471) target = $region92
        $region91: #{tpu_custom_call.1} parent=67 // pred_region
          %475 = dma.done [#allocation12], 1024
        $region92: #{tpu_custom_call.1} parent=67 // pred_fallthru
          _
        %s476 = sand.u32 %s40, 1
        %s477 = scalar_lea.sflag [#allocation3], %s476
        %s478 = sand.u32 %s40, 1
        %s479 = smul.addr %s478, 8
        %s480 = scalar_lea.vmem [#allocation2], %s479
        %p481 = pneg %p53
        %p482 = pneg %p50
        %p483 = pneg %p74
        %p484 = pneg %p71
        %p485 = pneg %p95
        %p486 = pneg %p92
        %p487 = pneg %p116
        %p488 = pneg %p113
        %p489 = pneg %p137
        %p490 = pneg %p134
        %p491 = pneg %p158
        %p492 = pneg %p155
        %p493 = pneg %p179
        %p494 = pneg %p176
        %p495 = pneg %p200
        %p496 = pneg %p197
        %p497 = pneg %p221
        %p498 = pneg %p218
        %p499 = pneg %p242
        %p500 = pneg %p239
        %p501 = pneg %p263
        %p502 = pneg %p260
        %p503 = pneg %p284
        %p504 = pneg %p281
        %p505 = pneg %p310
        %p506 = pneg %p307
        %s507 = sand.u32 %s297, 1
        %s508 = scalar_lea.sflag [#allocation4], %s507
        %s509 = sand.u32 %s297, 1
        %s510 = smul.addr %s509, 8
        %s511 = scalar_lea.vmem [#allocation13], %s510
        %v513 = vld [vmem:[%s445] sm:$0xff]
        %v514 = vld [vmem:[#allocation5] sm:$0x1]
        %v515 = vld [vmem:[%s2] sm:$0x1]
        %516 = vadd.xlane.f32.xlu0 %v513
        %v517 = vpop.xlane.xlu0 %516
        %v518 = vrcp.pop 32.0
        %v519 = vmul.f32 32.0, %v518
        %v520 = vsub.f32 1.0, %v519
        %v521 = vmul.f32 %v518, %v520
        %v522 = vadd.f32 %v518, %v521
        %vm523 = vweird.f32 %v518
        %v524 = vsel %vm523, %v518, %v522
        %v525 = vmul.f32 %v517, %v524
        %v526 = vsub.f32 %v513, %v525
        %v527 = vlaneseq
        %v528 = vand.u32 %v527, 127
        %vm529 = vcmp.lt.s32.totalorder %v528, 32
        %v530 = vsel %vm529, 1, 0
        %v531 = vcvt.s32.f32 %v530
        %v532 = vmul.f32 %v526, %v531
        %v533 = vmul.f32 %v532, %v532
        %534 = vadd.xlane.f32.xlu0 %v533
        %v535 = vpop.xlane.xlu0 %534
        %v536 = vmul.f32 %v535, %v524
        %v537 = vadd.f32 %v536, 1e-05
        %v538 = vrsqrt.pop %v537
        %v539 = vmul.f32 %v538, %v537
        %v540 = vmul.f32 %v539, %v538
        %v541 = vmul.f32 0.5, %v540
        %v542 = vsub.f32 1.5, %v541
        %v543 = vmul.f32 %v538, %v542
        %vm544 = vweird.f32 %v537
        %vm545 = vweird.f32 %v538
        %vm546 = vmor %vm544, %vm545
        %v547 = vsel %vm546, %v538, %v543
        %v548 = vmul.f32 %v532, %v547
        %v550 = vperm.slane %v514, 0
        %v552 = vmul.f32 %v548, %v550
        %v554 = vperm.slane %v515, 0
        %v556 = vadd.f32 %v552, %v554
        %v557 = vpack.c.bf16 %v556, %v556
        %v558 = vld [vmem:[#allocation7] sm:$0xff]
        %v559 = vld [vmem:[#allocation7 + $0x8] sm:$0xf]
        %v560 = vld [vmem:[#allocation7 + $0xc] sm:$0xff]
        %v561 = vld [vmem:[#allocation7 + $0x14] sm:$0xf]
        %v562 = vld [vmem:[#allocation7 + $0x18] sm:$0xff]
        %v563 = vld [vmem:[#allocation7 + $0x20] sm:$0xf]
        %v564 = vld [vmem:[#allocation7 + $0x24] sm:$0xff]
        %v565 = vld [vmem:[#allocation7 + $0x2c] sm:$0xf]
        %v566 = vld [vmem:[#allocation7 + $0x30] sm:$0xff]
        %v567 = vld [vmem:[#allocation7 + $0x38] sm:$0xf]
        %v568 = vld [vmem:[#allocation7 + $0x3c] sm:$0xff]
        %v569 = vld [vmem:[#allocation7 + $0x44] sm:$0xf]
        %v570 = vld [vmem:[#allocation7 + $0x48] sm:$0xff]
        %v571 = vld [vmem:[#allocation7 + $0x50] sm:$0xf]
        %v572 = vld [vmem:[#allocation7 + $0x54] sm:$0xff]
        %v573 = vld [vmem:[#allocation7 + $0x5c] sm:$0xf]
        %v574 = vld [vmem:[#allocation7 + $0x60] sm:$0xff]
        %v575 = vld [vmem:[#allocation7 + $0x68] sm:$0xf]
        %v576 = vld [vmem:[#allocation7 + $0x6c] sm:$0xff]
        %v577 = vld [vmem:[#allocation7 + $0x74] sm:$0xf]
        %v578 = vld [vmem:[#allocation7 + $0x78] sm:$0xff]
        %v579 = vld [vmem:[#allocation7 + $0x80] sm:$0xf]
        %v580 = vld [vmem:[#allocation7 + $0x84] sm:$0xff]
        %v581 = vld [vmem:[#allocation7 + $0x8c] sm:$0xf]
        %v582 = vld [vmem:[#allocation7 + $0x90] sm:$0xff]
        %v583 = vld [vmem:[#allocation7 + $0x98] sm:$0xf]
        %v584 = vld [vmem:[#allocation7 + $0x9c] sm:$0xff]
        %v585 = vld [vmem:[#allocation7 + $0xa4] sm:$0xf]
        %v586 = vld [vmem:[#allocation7 + $0xa8] sm:$0xff]
        %v587 = vld [vmem:[#allocation7 + $0xb0] sm:$0xf]
        %v588 = vld [vmem:[#allocation7 + $0xb4] sm:$0xff]
        %v589 = vld [vmem:[#allocation7 + $0xbc] sm:$0xf]
        %v622 = vunpack.c.l.b16 %v558
        %v623 = vunpack.c.h.b16 %v558
        %v624 = vunpack.c.l.b16 %v559
        %v625 = vunpack.c.l.b16 %v560
        %v626 = vunpack.c.h.b16 %v560
        %v627 = vunpack.c.l.b16 %v561
        %v628 = vunpack.c.l.b16 %v562
        %v629 = vunpack.c.h.b16 %v562
        %v630 = vunpack.c.l.b16 %v563
        %v631 = vunpack.c.l.b16 %v564
        %v632 = vunpack.c.h.b16 %v564
        %v633 = vunpack.c.l.b16 %v565
        %v634 = vunpack.c.l.b16 %v566
        %v635 = vunpack.c.h.b16 %v566
        %v636 = vunpack.c.l.b16 %v567
        %v637 = vunpack.c.l.b16 %v568
        %v638 = vunpack.c.h.b16 %v568
        %v639 = vunpack.c.l.b16 %v569
        %v640 = vunpack.c.l.b16 %v570
        %v641 = vunpack.c.h.b16 %v570
        %v642 = vunpack.c.l.b16 %v571
        %v643 = vunpack.c.l.b16 %v572
        %v644 = vunpack.c.h.b16 %v572
        %v645 = vunpack.c.l.b16 %v573
        %v646 = vunpack.c.l.b16 %v574
        %v647 = vunpack.c.h.b16 %v574
        %v648 = vunpack.c.l.b16 %v575
        %v649 = vunpack.c.l.b16 %v576
        %v650 = vunpack.c.h.b16 %v576
        %v651 = vunpack.c.l.b16 %v577
        %v652 = vunpack.c.l.b16 %v578
        %v653 = vunpack.c.h.b16 %v578
        %v654 = vunpack.c.l.b16 %v579
        %v655 = vunpack.c.l.b16 %v580
        %v656 = vunpack.c.h.b16 %v580
        %v657 = vunpack.c.l.b16 %v581
        %v658 = vunpack.c.l.b16 %v582
        %v659 = vunpack.c.h.b16 %v582
        %v660 = vunpack.c.l.b16 %v583
        %v661 = vunpack.c.l.b16 %v584
        %v662 = vunpack.c.h.b16 %v584
        %v663 = vunpack.c.l.b16 %v585
        %v664 = vunpack.c.l.b16 %v586
        %v665 = vunpack.c.h.b16 %v586
        %v666 = vunpack.c.l.b16 %v587
        %v667 = vunpack.c.l.b16 %v588
        %v668 = vunpack.c.h.b16 %v588
        %v669 = vunpack.c.l.b16 %v589
        %v670 = vpack.c.b16 %v625, %v622
        %v671 = vpack.c.b16 %v626, %v623
        %v672 = vpack.c.b16 %v627, %v624
        %v673 = vpack.c.b16 %v631, %v628
        %v674 = vpack.c.b16 %v632, %v629
        %v675 = vpack.c.b16 %v633, %v630
        %v676 = vpack.c.b16 %v637, %v634
        %v677 = vpack.c.b16 %v638, %v635
        %v678 = vpack.c.b16 %v639, %v636
        %v679 = vpack.c.b16 %v643, %v640
        %v680 = vpack.c.b16 %v644, %v641
        %v681 = vpack.c.b16 %v645, %v642
        %v682 = vpack.c.b16 %v649, %v646
        %v683 = vpack.c.b16 %v650, %v647
        %v684 = vpack.c.b16 %v651, %v648
        %v685 = vpack.c.b16 %v655, %v652
        %v686 = vpack.c.b16 %v656, %v653
        %v687 = vpack.c.b16 %v657, %v654
        %v688 = vpack.c.b16 %v661, %v658
        %v689 = vpack.c.b16 %v662, %v659
        %v690 = vpack.c.b16 %v663, %v660
        %v691 = vpack.c.b16 %v667, %v664
        %v692 = vpack.c.b16 %v668, %v665
        %v693 = vpack.c.b16 %v669, %v666
        %718 = vmatpush.bf16.msra.mxu0 %v691
        %719 = vmatpush.bf16.msra.mxu0 %v688
        %720 = vmatpush.bf16.msra.mxu0 %v685
        %721 = vmatpush.bf16.msra.mxu0 %v682
        %722 = vmatpush.bf16.msra.mxu0 %v679
        %723 = vmatpush.bf16.msra.mxu0 %v676
        %724 = vmatpush.bf16.msra.mxu0 %v673
        %725 = vmatpush.bf16.msra.mxu0 %v670
        %726 = vmatmul.bf16.gmra.mxu0 %v557
        %v727 = vpop.f32.mrf.mxu0
        %v728 = vadd.f32 0.0, %v727
        %v729 = vpop.f32.mrf.mxu0
        %730 = vdwg.mxu0
        %731 = vmatpush.bf16.msra.mxu0 %v692
        %732 = vmatpush.bf16.msra.mxu0 %v689
        %733 = vmatpush.bf16.msra.mxu0 %v686
        %734 = vmatpush.bf16.msra.mxu0 %v683
        %735 = vmatpush.bf16.msra.mxu0 %v680
        %736 = vmatpush.bf16.msra.mxu0 %v677
        %737 = vmatpush.bf16.msra.mxu0 %v674
        %738 = vmatpush.bf16.msra.mxu0 %v671
        %739 = vmatmul.bf16.gmra.mxu0 %v557
        %v740 = vpop.f32.mrf.mxu0
        %v741 = vadd.f32 0.0, %v740
        %v742 = vpop.f32.mrf.mxu0
        %743 = vdwg.mxu0
        %744 = vmatpush.bf16.msra.mxu0 %v693
        %745 = vmatpush.bf16.msra.mxu0 %v690
        %746 = vmatpush.bf16.msra.mxu0 %v687
        %747 = vmatpush.bf16.msra.mxu0 %v684
        %748 = vmatpush.bf16.msra.mxu0 %v681
        %749 = vmatpush.bf16.msra.mxu0 %v678
        %750 = vmatpush.bf16.msra.mxu0 %v675
        %751 = vmatpush.bf16.msra.mxu0 %v672
        %752 = vmatmul.bf16.gmra.mxu0 %v557
        %v753 = vpop.f32.mrf.mxu0
        %v754 = vadd.f32 0.0, %v753
        %v755 = vpop.f32.mrf.mxu0
        %756 = vdwg.mxu0
        %v757 = vpack.c.bf16 %v754, %v754
        %v758 = vpack.c.bf16 %v728, %v728
        %v759 = vpack.c.bf16 %v741, %v741
        %vm760 = vcmask 130048
        %v762 = vsel %vm760, %v758, 0
        %v765 = vsel %vm760, %v759, 0
        %767 = vmatpush.bf16.xpose.msra.mxu0 0
        %768 = vmatpush.bf16.xpose.msra.mxu0 0
        %769 = vmatpush.bf16.xpose.msra.mxu0 0
        %770 = vmatpush.bf16.xpose.msra.mxu0 0
        %771 = vmatpush.bf16.xpose.msra.mxu0 0
        %772 = vmatpush.bf16.xpose.msra.mxu0 0
        %773 = vmatpush.bf16.xpose.msra.mxu0 0
        %774 = vmatpush.bf16.xpose.msra.mxu0 %v765
        %775 = vmatmul.bf16.gmra.mxu0 %v762
        %v776 = vpop.f32.mrf.mxu0
        %v777 = vadd.f32 0.0, %v776
        %v778 = vpop.f32.mrf.mxu0
        %779 = vdwg.mxu0
        %v780 = vmul.f32 %v777, 0.25
        %vm781 = vcmask 64512
        %v782 = vsel %vm781, %v780, -inf
        %783 = vmax.xlane.f32.xlu0 %v782
        %v784 = vpop.xlane.xlu0 %783
        %v785 = vsub.f32 %v780, %v784
        %v786 = vmul.f32 %v785, 1.442695
        %v787 = vpow.pop %v786
        %v788 = vsel %vm781, %v787, 0.0
        %789 = vadd.xlane.f32.xlu0 %v788
        %v790 = vpop.xlane.xlu0 %789
        %v791 = vrcp.pop %v790
        %v792 = vmul.f32 %v787, %v791
        %v793 = vpack.c.bf16 %v792, %v792
        %v795 = vsel %vm781, %v793, 0
        %vm797 = vcmask 1043456
        %v799 = vsel %vm797, %v757, 0
        %801 = vmatpush.bf16.msra.mxu0 0
        %802 = vmatpush.bf16.msra.mxu0 0
        %803 = vmatpush.bf16.msra.mxu0 0
        %804 = vmatpush.bf16.msra.mxu0 0
        %805 = vmatpush.bf16.msra.mxu0 0
        %806 = vmatpush.bf16.msra.mxu0 0
        %807 = vmatpush.bf16.msra.mxu0 0
        %808 = vmatpush.bf16.msra.mxu0 %v799
        %809 = vmatmul.bf16.gmra.mxu0 %v795
        %v810 = vpop.f32.mrf.mxu0
        %v811 = vadd.f32 0.0, %v810
        %v812 = vpop.f32.mrf.mxu0
        %813 = vdwg.mxu0
        %v815 = vunpack.c.l.b16 %v758
        %v816 = vpack.c.b16 %v815, %v815
        %817 = vrot.lane.b32.xlu0 %v816, 112
        %v818 = vpop.permute.xlu0 %817
        %v820 = vunpack.c.l.b16 %v759
        %v821 = vpack.c.b16 %v820, %v820
        %822 = vrot.lane.b32.xlu0 %v821, 112
        %v823 = vpop.permute.xlu0 %822
        %v825 = vsel %vm760, %v818, 0
        %v828 = vsel %vm760, %v823, 0
        %830 = vmatpush.bf16.xpose.msra.mxu0 0
        %831 = vmatpush.bf16.xpose.msra.mxu0 0
        %832 = vmatpush.bf16.xpose.msra.mxu0 0
        %833 = vmatpush.bf16.xpose.msra.mxu0 0
        %834 = vmatpush.bf16.xpose.msra.mxu0 0
        %835 = vmatpush.bf16.xpose.msra.mxu0 0
        %836 = vmatpush.bf16.xpose.msra.mxu0 0
        %837 = vmatpush.bf16.xpose.msra.mxu0 %v828
        %838 = vmatmul.bf16.gmra.mxu0 %v825
        %v839 = vpop.f32.mrf.mxu0
        %v840 = vadd.f32 0.0, %v839
        %v841 = vpop.f32.mrf.mxu0
        %842 = vdwg.mxu0
        %v843 = vmul.f32 %v840, 0.25
        %v844 = vsel %vm781, %v843, -inf
        %845 = vmax.xlane.f32.xlu0 %v844
        %v846 = vpop.xlane.xlu0 %845
        %v847 = vsub.f32 %v843, %v846
        %v848 = vmul.f32 %v847, 1.442695
        %v849 = vpow.pop %v848
        %v850 = vsel %vm781, %v849, 0.0
        %851 = vadd.xlane.f32.xlu0 %v850
        %v852 = vpop.xlane.xlu0 %851
        %v853 = vrcp.pop %v852
        %v854 = vmul.f32 %v849, %v853
        %v855 = vpack.c.bf16 %v854, %v854
        %v857 = vunpack.c.l.b16 %v757
        %v858 = vpack.c.b16 %v857, %v857
        %859 = vrot.lane.b32.xlu0 %v858, 112
        %v860 = vpop.permute.xlu0 %859
        %v862 = vsel %vm781, %v855, 0
        %v865 = vsel %vm797, %v860, 0
        %867 = vmatpush.bf16.msra.mxu0 0
        %868 = vmatpush.bf16.msra.mxu0 0
        %869 = vmatpush.bf16.msra.mxu0 0
        %870 = vmatpush.bf16.msra.mxu0 0
        %871 = vmatpush.bf16.msra.mxu0 0
        %872 = vmatpush.bf16.msra.mxu0 0
        %873 = vmatpush.bf16.msra.mxu0 0
        %874 = vmatpush.bf16.msra.mxu0 %v865
        %875 = vmatmul.bf16.gmra.mxu0 %v862
        %v876 = vpop.f32.mrf.mxu0
        %v877 = vadd.f32 0.0, %v876
        %v878 = vpop.f32.mrf.mxu0
        %879 = vdwg.mxu0
        %880 = vrot.lane.b32.xlu0 %v816, 96
        %v881 = vpop.permute.xlu0 %880
        %882 = vrot.lane.b32.xlu0 %v821, 96
        %v883 = vpop.permute.xlu0 %882
        %v885 = vsel %vm760, %v881, 0
        %v888 = vsel %vm760, %v883, 0
        %890 = vmatpush.bf16.xpose.msra.mxu0 0
        %891 = vmatpush.bf16.xpose.msra.mxu0 0
        %892 = vmatpush.bf16.xpose.msra.mxu0 0
        %893 = vmatpush.bf16.xpose.msra.mxu0 0
        %894 = vmatpush.bf16.xpose.msra.mxu0 0
        %895 = vmatpush.bf16.xpose.msra.mxu0 0
        %896 = vmatpush.bf16.xpose.msra.mxu0 0
        %897 = vmatpush.bf16.xpose.msra.mxu0 %v888
        %898 = vmatmul.bf16.gmra.mxu0 %v885
        %v899 = vpop.f32.mrf.mxu0
        %v900 = vadd.f32 0.0, %v899
        %v901 = vpop.f32.mrf.mxu0
        %902 = vdwg.mxu0
        %v903 = vmul.f32 %v900, 0.25
        %v904 = vsel %vm781, %v903, -inf
        %905 = vmax.xlane.f32.xlu0 %v904
        %v906 = vpop.xlane.xlu0 %905
        %v907 = vsub.f32 %v903, %v906
        %v908 = vmul.f32 %v907, 1.442695
        %v909 = vpow.pop %v908
        %v910 = vsel %vm781, %v909, 0.0
        %911 = vadd.xlane.f32.xlu0 %v910
        %v912 = vpop.xlane.xlu0 %911
        %v913 = vrcp.pop %v912
        %v914 = vmul.f32 %v909, %v913
        %v915 = vpack.c.bf16 %v914, %v914
        %916 = vrot.lane.b32.xlu0 %v858, 96
        %v917 = vpop.permute.xlu0 %916
        %v919 = vsel %vm781, %v915, 0
        %v922 = vsel %vm797, %v917, 0
        %924 = vmatpush.bf16.msra.mxu0 0
        %925 = vmatpush.bf16.msra.mxu0 0
        %926 = vmatpush.bf16.msra.mxu0 0
        %927 = vmatpush.bf16.msra.mxu0 0
        %928 = vmatpush.bf16.msra.mxu0 0
        %929 = vmatpush.bf16.msra.mxu0 0
        %930 = vmatpush.bf16.msra.mxu0 0
        %931 = vmatpush.bf16.msra.mxu0 %v922
        %932 = vmatmul.bf16.gmra.mxu0 %v919
        %v933 = vpop.f32.mrf.mxu0
        %v934 = vadd.f32 0.0, %v933
        %v935 = vpop.f32.mrf.mxu0
        %936 = vdwg.mxu0
        %937 = vrot.lane.b32.xlu0 %v816, 80
        %v938 = vpop.permute.xlu0 %937
        %939 = vrot.lane.b32.xlu0 %v821, 80
        %v940 = vpop.permute.xlu0 %939
        %v942 = vsel %vm760, %v938, 0
        %v945 = vsel %vm760, %v940, 0
        %947 = vmatpush.bf16.xpose.msra.mxu0 0
        %948 = vmatpush.bf16.xpose.msra.mxu0 0
        %949 = vmatpush.bf16.xpose.msra.mxu0 0
        %950 = vmatpush.bf16.xpose.msra.mxu0 0
        %951 = vmatpush.bf16.xpose.msra.mxu0 0
        %952 = vmatpush.bf16.xpose.msra.mxu0 0
        %953 = vmatpush.bf16.xpose.msra.mxu0 0
        %954 = vmatpush.bf16.xpose.msra.mxu0 %v945
        %955 = vmatmul.bf16.gmra.mxu0 %v942
        %v956 = vpop.f32.mrf.mxu0
        %v957 = vadd.f32 0.0, %v956
        %v958 = vpop.f32.mrf.mxu0
        %959 = vdwg.mxu0
        %v960 = vmul.f32 %v957, 0.25
        %v961 = vsel %vm781, %v960, -inf
        %962 = vmax.xlane.f32.xlu0 %v961
        %v963 = vpop.xlane.xlu0 %962
        %v964 = vsub.f32 %v960, %v963
        %v965 = vmul.f32 %v964, 1.442695
        %v966 = vpow.pop %v965
        %v967 = vsel %vm781, %v966, 0.0
        %968 = vadd.xlane.f32.xlu0 %v967
        %v969 = vpop.xlane.xlu0 %968
        %v970 = vrcp.pop %v969
        %v971 = vmul.f32 %v966, %v970
        %v972 = vpack.c.bf16 %v971, %v971
        %973 = vrot.lane.b32.xlu0 %v858, 80
        %v974 = vpop.permute.xlu0 %973
        %v976 = vsel %vm781, %v972, 0
        %v979 = vsel %vm797, %v974, 0
        %981 = vmatpush.bf16.msra.mxu0 0
        %982 = vmatpush.bf16.msra.mxu0 0
        %983 = vmatpush.bf16.msra.mxu0 0
        %984 = vmatpush.bf16.msra.mxu0 0
        %985 = vmatpush.bf16.msra.mxu0 0
        %986 = vmatpush.bf16.msra.mxu0 0
        %987 = vmatpush.bf16.msra.mxu0 0
        %988 = vmatpush.bf16.msra.mxu0 %v979
        %989 = vmatmul.bf16.gmra.mxu0 %v976
        %v990 = vpop.f32.mrf.mxu0
        %v991 = vadd.f32 0.0, %v990
        %v992 = vpop.f32.mrf.mxu0
        %993 = vdwg.mxu0
        %995 = vrot.lane.b32.xlu0 %v877, 16
        %v996 = vpop.permute.xlu0 %995
        %999 = vrot.lane.b32.xlu0 %v934, 32
        %v1000 = vpop.permute.xlu0 %999
        %1003 = vrot.lane.b32.xlu0 %v991, 48
        %v1004 = vpop.permute.xlu0 %1003
        %v1006 = vsel %vm760, %v811, %v996
        %vm1007 = vcmask 261120
        %v1008 = vsel %vm1007, %v1006, %v1000
        %vm1009 = vcmask 392192
        %v1010 = vsel %vm1009, %v1008, %v1004
        %vm1011 = vcmask 523264
        %v1012 = vsel %vm1011, %v1010, 0.0
        %v1013 = vpack.c.bf16 %v1012, %v1012
        %v1014 = vld [vmem:[#allocation8] sm:$0xf]
        %v1015 = vld [vmem:[#allocation8 + $0x4] sm:$0xf]
        %v1016 = vld [vmem:[#allocation8 + $0x8] sm:$0xf]
        %v1017 = vld [vmem:[#allocation8 + $0xc] sm:$0xf]
        %v1018 = vld [vmem:[#allocation8 + $0x10] sm:$0xf]
        %v1019 = vld [vmem:[#allocation8 + $0x14] sm:$0xf]
        %v1020 = vld [vmem:[#allocation8 + $0x18] sm:$0xf]
        %v1021 = vld [vmem:[#allocation8 + $0x1c] sm:$0xf]
        %v1022 = vld [vmem:[#allocation8 + $0x20] sm:$0xf]
        %v1023 = vld [vmem:[#allocation8 + $0x24] sm:$0xf]
        %v1024 = vld [vmem:[#allocation8 + $0x28] sm:$0xf]
        %v1025 = vld [vmem:[#allocation8 + $0x2c] sm:$0xf]
        %v1026 = vld [vmem:[#allocation8 + $0x30] sm:$0xf]
        %v1027 = vld [vmem:[#allocation8 + $0x34] sm:$0xf]
        %v1028 = vld [vmem:[#allocation8 + $0x38] sm:$0xf]
        %v1029 = vld [vmem:[#allocation8 + $0x3c] sm:$0xf]
        %v1046 = vunpack.c.l.b16 %v1014
        %v1047 = vunpack.c.l.b16 %v1015
        %v1048 = vunpack.c.l.b16 %v1016
        %v1049 = vunpack.c.l.b16 %v1017
        %v1050 = vunpack.c.l.b16 %v1018
        %v1051 = vunpack.c.l.b16 %v1019
        %v1052 = vunpack.c.l.b16 %v1020
        %v1053 = vunpack.c.l.b16 %v1021
        %v1054 = vunpack.c.l.b16 %v1022
        %v1055 = vunpack.c.l.b16 %v1023
        %v1056 = vunpack.c.l.b16 %v1024
        %v1057 = vunpack.c.l.b16 %v1025
        %v1058 = vunpack.c.l.b16 %v1026
        %v1059 = vunpack.c.l.b16 %v1027
        %v1060 = vunpack.c.l.b16 %v1028
        %v1061 = vunpack.c.l.b16 %v1029
        %v1062 = vpack.c.b16 %v1047, %v1046
        %v1063 = vpack.c.b16 %v1049, %v1048
        %v1064 = vpack.c.b16 %v1051, %v1050
        %v1065 = vpack.c.b16 %v1053, %v1052
        %v1066 = vpack.c.b16 %v1055, %v1054
        %v1067 = vpack.c.b16 %v1057, %v1056
        %v1068 = vpack.c.b16 %v1059, %v1058
        %v1069 = vpack.c.b16 %v1061, %v1060
        %1078 = vmatpush.bf16.msra.mxu0 %v1069
        %1079 = vmatpush.bf16.msra.mxu0 %v1068
        %1080 = vmatpush.bf16.msra.mxu0 %v1067
        %1081 = vmatpush.bf16.msra.mxu0 %v1066
        %1082 = vmatpush.bf16.msra.mxu0 %v1065
        %1083 = vmatpush.bf16.msra.mxu0 %v1064
        %1084 = vmatpush.bf16.msra.mxu0 %v1063
        %1085 = vmatpush.bf16.msra.mxu0 %v1062
        %1086 = vmatmul.bf16.gmra.mxu0 %v1013
        %v1087 = vpop.f32.mrf.mxu0
        %v1088 = vadd.f32 0.0, %v1087
        %v1089 = vpop.f32.mrf.mxu0
        %1090 = vdwg.mxu0
        %v1091 = vadd.f32 %v513, %v1088
        %v1092 = vld [vmem:[%s5] sm:$0x1]
        %v1094 = vperm.slane %v1092, 0
        %v1096 = vadd.f32 %v1091, %v1094
        %v1097 = vld [vmem:[%s6] sm:$0x1]
        %v1098 = vld [vmem:[%s7] sm:$0x1]
        %1099 = vadd.xlane.f32.xlu0 %v1096
        %v1100 = vpop.xlane.xlu0 %1099
        %v1101 = vmul.f32 %v1100, %v524
        %v1102 = vsub.f32 %v1096, %v1101
        %v1103 = vmul.f32 %v1102, %v531
        %v1104 = vmul.f32 %v1103, %v1103
        %1105 = vadd.xlane.f32.xlu0 %v1104
        %v1106 = vpop.xlane.xlu0 %1105
        %v1107 = vmul.f32 %v1106, %v524
        %v1108 = vadd.f32 %v1107, 1e-05
        %v1109 = vrsqrt.pop %v1108
        %v1110 = vmul.f32 %v1109, %v1108
        %v1111 = vmul.f32 %v1110, %v1109
        %v1112 = vmul.f32 0.5, %v1111
        %v1113 = vsub.f32 1.5, %v1112
        %v1114 = vmul.f32 %v1109, %v1113
        %vm1115 = vweird.f32 %v1108
        %vm1116 = vweird.f32 %v1109
        %vm1117 = vmor %vm1115, %vm1116
        %v1118 = vsel %vm1117, %v1109, %v1114
        %v1119 = vmul.f32 %v1103, %v1118
        %v1121 = vperm.slane %v1097, 0
        %v1123 = vmul.f32 %v1119, %v1121
        %v1125 = vperm.slane %v1098, 0
        %v1127 = vadd.f32 %v1123, %v1125
        %v1128 = vpack.c.bf16 %v1127, %v1127
        %v1129 = vld [vmem:[#allocation10] sm:$0xf]
        %v1130 = vld [vmem:[#allocation10 + $0x4] sm:$0xf]
        %v1131 = vld [vmem:[#allocation10 + $0x8] sm:$0xf]
        %v1132 = vld [vmem:[#allocation10 + $0xc] sm:$0xf]
        %v1133 = vld [vmem:[#allocation10 + $0x10] sm:$0xf]
        %v1134 = vld [vmem:[#allocation10 + $0x14] sm:$0xf]
        %v1135 = vld [vmem:[#allocation10 + $0x18] sm:$0xf]
        %v1136 = vld [vmem:[#allocation10 + $0x1c] sm:$0xf]
        %v1137 = vld [vmem:[#allocation10 + $0x20] sm:$0xf]
        %v1138 = vld [vmem:[#allocation10 + $0x24] sm:$0xf]
        %v1139 = vld [vmem:[#allocation10 + $0x28] sm:$0xf]
        %v1140 = vld [vmem:[#allocation10 + $0x2c] sm:$0xf]
        %v1141 = vld [vmem:[#allocation10 + $0x30] sm:$0xf]
        %v1142 = vld [vmem:[#allocation10 + $0x34] sm:$0xf]
        %v1143 = vld [vmem:[#allocation10 + $0x38] sm:$0xf]
        %v1144 = vld [vmem:[#allocation10 + $0x3c] sm:$0xf]
        %v1145 = vld [vmem:[%s9] sm:$0x1]
        %v1147 = vperm.slane %v1145, 0
        %v1165 = vunpack.c.l.b16 %v1129
        %v1166 = vunpack.c.l.b16 %v1130
        %v1167 = vunpack.c.l.b16 %v1131
        %v1168 = vunpack.c.l.b16 %v1132
        %v1169 = vunpack.c.l.b16 %v1133
        %v1170 = vunpack.c.l.b16 %v1134
        %v1171 = vunpack.c.l.b16 %v1135
        %v1172 = vunpack.c.l.b16 %v1136
        %v1173 = vunpack.c.l.b16 %v1137
        %v1174 = vunpack.c.l.b16 %v1138
        %v1175 = vunpack.c.l.b16 %v1139
        %v1176 = vunpack.c.l.b16 %v1140
        %v1177 = vunpack.c.l.b16 %v1141
        %v1178 = vunpack.c.l.b16 %v1142
        %v1179 = vunpack.c.l.b16 %v1143
        %v1180 = vunpack.c.l.b16 %v1144
        %v1181 = vpack.c.b16 %v1166, %v1165
        %v1182 = vpack.c.b16 %v1168, %v1167
        %v1183 = vpack.c.b16 %v1170, %v1169
        %v1184 = vpack.c.b16 %v1172, %v1171
        %v1185 = vpack.c.b16 %v1174, %v1173
        %v1186 = vpack.c.b16 %v1176, %v1175
        %v1187 = vpack.c.b16 %v1178, %v1177
        %v1188 = vpack.c.b16 %v1180, %v1179
        %1197 = vmatpush.bf16.msra.mxu0 %v1188
        %1198 = vmatpush.bf16.msra.mxu0 %v1187
        %1199 = vmatpush.bf16.msra.mxu0 %v1186
        %1200 = vmatpush.bf16.msra.mxu0 %v1185
        %1201 = vmatpush.bf16.msra.mxu0 %v1184
        %1202 = vmatpush.bf16.msra.mxu0 %v1183
        %1203 = vmatpush.bf16.msra.mxu0 %v1182
        %1204 = vmatpush.bf16.msra.mxu0 %v1181
        %1205 = vmatmul.bf16.gmra.mxu0 %v1128
        %v1206 = vpop.f32.mrf.mxu0
        %v1207 = vadd.f32 %v1147, %v1206
        %v1208 = vpop.f32.mrf.mxu0
        %1209 = vdwg.mxu0
        %v1210 = vmul.f32 %v1207, 0.5
        %v1211 = vmul.f32 %v1207, %v1207
        %v1212 = vmul.f32 %v1211, %v1207
        %v1213 = vmul.f32 %v1212, 0.044715
        %v1214 = vadd.f32 %v1207, %v1213
        %v1215 = vmul.f32 %v1214, 0.7978846
        %v1216 = vtanh.pop %v1215
        %v1217 = vadd.f32 %v1216, 1.0
        %v1218 = vmul.f32 %v1210, %v1217
        %v1219 = vpack.c.bf16 %v1218, %v1218
        %v1220 = vld [vmem:[#allocation11] sm:$0xf]
        %v1221 = vld [vmem:[#allocation11 + $0x4] sm:$0xf]
        %v1222 = vld [vmem:[#allocation11 + $0x8] sm:$0xf]
        %v1223 = vld [vmem:[#allocation11 + $0xc] sm:$0xf]
        %v1224 = vld [vmem:[#allocation11 + $0x10] sm:$0xf]
        %v1225 = vld [vmem:[#allocation11 + $0x14] sm:$0xf]
        %v1226 = vld [vmem:[#allocation11 + $0x18] sm:$0xf]
        %v1227 = vld [vmem:[#allocation11 + $0x1c] sm:$0xf]
        %v1228 = vld [vmem:[#allocation11 + $0x20] sm:$0xf]
        %v1229 = vld [vmem:[#allocation11 + $0x24] sm:$0xf]
        %v1230 = vld [vmem:[#allocation11 + $0x28] sm:$0xf]
        %v1231 = vld [vmem:[#allocation11 + $0x2c] sm:$0xf]
        %v1232 = vld [vmem:[#allocation11 + $0x30] sm:$0xf]
        %v1233 = vld [vmem:[#allocation11 + $0x34] sm:$0xf]
        %v1234 = vld [vmem:[#allocation11 + $0x38] sm:$0xf]
        %v1235 = vld [vmem:[#allocation11 + $0x3c] sm:$0xf]
        %v1236 = vld [vmem:[%s11] sm:$0x1]
        %v1238 = vperm.slane %v1236, 0
        %v1256 = vunpack.c.l.b16 %v1220
        %v1257 = vunpack.c.l.b16 %v1221
        %v1258 = vunpack.c.l.b16 %v1222
        %v1259 = vunpack.c.l.b16 %v1223
        %v1260 = vunpack.c.l.b16 %v1224
        %v1261 = vunpack.c.l.b16 %v1225
        %v1262 = vunpack.c.l.b16 %v1226
        %v1263 = vunpack.c.l.b16 %v1227
        %v1264 = vunpack.c.l.b16 %v1228
        %v1265 = vunpack.c.l.b16 %v1229
        %v1266 = vunpack.c.l.b16 %v1230
        %v1267 = vunpack.c.l.b16 %v1231
        %v1268 = vunpack.c.l.b16 %v1232
        %v1269 = vunpack.c.l.b16 %v1233
        %v1270 = vunpack.c.l.b16 %v1234
        %v1271 = vunpack.c.l.b16 %v1235
        %v1272 = vpack.c.b16 %v1257, %v1256
        %v1273 = vpack.c.b16 %v1259, %v1258
        %v1274 = vpack.c.b16 %v1261, %v1260
        %v1275 = vpack.c.b16 %v1263, %v1262
        %v1276 = vpack.c.b16 %v1265, %v1264
        %v1277 = vpack.c.b16 %v1267, %v1266
        %v1278 = vpack.c.b16 %v1269, %v1268
        %v1279 = vpack.c.b16 %v1271, %v1270
        %1288 = vmatpush.bf16.msra.mxu0 %v1279
        %1289 = vmatpush.bf16.msra.mxu0 %v1278
        %1290 = vmatpush.bf16.msra.mxu0 %v1277
        %1291 = vmatpush.bf16.msra.mxu0 %v1276
        %1292 = vmatpush.bf16.msra.mxu0 %v1275
        %1293 = vmatpush.bf16.msra.mxu0 %v1274
        %1294 = vmatpush.bf16.msra.mxu0 %v1273
        %1295 = vmatpush.bf16.msra.mxu0 %v1272
        %1296 = vmatmul.bf16.gmra.mxu0 %v1219
        %v1297 = vpop.f32.mrf.mxu0
        %v1298 = vadd.f32 %v1238, %v1297
        %v1299 = vpop.f32.mrf.mxu0
        %1300 = vdwg.mxu0
        %v1301 = vadd.f32 %v1096, %v1298
        %1302 = vst [vmem:[%s511] sm:$0xff] %v1301
        %s1303 = sand.u32 %s297, 1
        %s1304 = scalar_lea.sflag [#allocation4], %s1303
        %s1305 = sand.u32 %s297, 1
        %s1306 = smul.addr %s1305, 8
        %s1307 = scalar_lea.vmem [#allocation13], %s1306
        // Predicated region
        $region93: #{tpu_custom_call.1} parent=67 // pred_check
          %p1308 = pneg %p307
        $region94: #{tpu_custom_call.1} parent=67 // pred_check_branch
          %1310 = sbr.rel (%p1308) target = $region96
        $region95: #{tpu_custom_call.1} parent=67 // pred_region
          %1312 = vsyncadd %s1304, 0
          %s1313 = smul.addr %s32, 8
          %s1314 = scalar_lea.hbm %s12, %s1313
          %s1316 = sshll.u32 %s1307, 4
          %s1317 = int_to_ptr.vmem [resolvable:$true] %s1316
          %s1318 = sshll.u32 %s1314, 4
          %s1319 = int_to_ptr.hbm [resolvable:$true] %s1318
          %1321 = dma.vmem_to_hbm [thread:$0]  %s1317, 128, %s1319, %s1304
        $region96: #{tpu_custom_call.1} parent=67 // pred_fallthru
          _
      $region68: #{tpu_custom_call.1} parent=5 // pred_fallthru
        _
      %p1322 = scmp.le.s32.totalorder 2, %s27
      // Predicated region
      $region97: #{tpu_custom_call.1} parent=5 // pred_check
        %p1323 = pneg %p1322
      $region98: #{tpu_custom_call.1} parent=5 // pred_check_branch
        %1325 = sbr.rel (%p1323) target = $region100
      $region99: #{tpu_custom_call.1} parent=5 // pred_region
        %s1326 = ssub.s32 %s27, 2
        // Predicated region
        $region101: #{tpu_custom_call.1} parent=99 // pred_check
          %p1327 = pneg %p313
        $region102: #{tpu_custom_call.1} parent=99 // pred_check_branch
          %1329 = sbr.rel (%p1327) target = $region104
        $region103: #{tpu_custom_call.1} parent=99 // pred_region
          %s1330 = sand.u32 %s298, 1
          %s1331 = scalar_lea.sflag [#allocation4], %s1330
          %s1332 = sand.u32 %s298, 1
          %s1333 = smul.addr %s1332, 8
          %s1334 = scalar_lea.vmem [#allocation13], %s1333
          %1336 = dma.done %s1331, 128
        $region104: #{tpu_custom_call.1} parent=99 // pred_fallthru
          _
      $region100: #{tpu_custom_call.1} parent=5 // pred_fallthru
        _
    $region6: #{tpu_custom_call.1} parent=1 // loop_footer
      %s31 = sadd.s32 1, %s27
    $region7: #{tpu_custom_call.1} parent=1 // loop_footer_branch
      %26 = sbr.rel target = $region3
    $region8: #{tpu_custom_call.1} parent=1 // loop_exit
      _
    %1337 = vsyncpa [#allocation3], 1
    %s1338 = scalar_lea.sflag [#allocation3], 1
    %1339 = vsyncpa %s1338, 1
    %1340 = vsyncpa [#allocation6], 1
    %1341 = vsyncpa [#allocation9], 1
    %1342 = vsyncpa [#allocation12], 1
    %1343 = vsyncpa [#allocation4], 1
    %s1344 = scalar_lea.sflag [#allocation4], 1
    %1345 = vsyncpa %s1344, 1

</llo_original>
